<compile_context>
chip_gen: v5e
topology: v5e:2x2
jax: 0.10.0
libtpu: 0.0.40
codegen_flags: <defaults>
</compile_context>

<pallas_src>
import math
import jax
import jax.numpy as jnp
from jax.experimental import pallas as pl
from jax.experimental.pallas import tpu as pltpu


# --------------------------------------------------------------------------
# Recurrent kernel: 2-layer GRU over a chunk of Tc time steps per grid step.
# --------------------------------------------------------------------------
def _gru_kernel(x_ref, h0_ref,
                wih0_ref, whh0_ref, bi0_ref, bh0_ref,
                wih1_ref, whh1_ref, bi1_ref, bh1_ref,
                embs_ref, ht_ref,
                h0_s, h1_s):
    c = pl.program_id(0)
    tc = x_ref.shape[0]          # static chunk length
    hidden = h0_s.shape[-1]

    @pl.when(c == 0)
    def _init():
        h0_s[...] = h0_ref[0].astype(jnp.float32)
        h1_s[...] = h0_ref[1].astype(jnp.float32)

    # Grid-invariant weights / folded biases: read once per chunk.
    wih0 = wih0_ref[...]
    whh0 = whh0_ref[...]
    bi0 = bi0_ref[...]
    bh0 = bh0_ref[...]
    wih1 = wih1_ref[...]
    whh1 = whh1_ref[...]
    bi1 = bi1_ref[...]
    bh1 = bh1_ref[...]

    def cell(x_in, h_prev, wih, whh, bi, bh):
        # Two packed matmuls per cell; lanes are [r | z | n].
        gi = jnp.dot(x_in, wih, preferred_element_type=jnp.float32) + bi
        gh = jnp.dot(h_prev, whh, preferred_element_type=jnp.float32) + bh
        rz = jax.nn.sigmoid(gi[:, :2 * hidden] + gh[:, :2 * hidden])
        r = rz[:, :hidden]
        z = rz[:, hidden:]
        n = jnp.tanh(gi[:, 2 * hidden:] + r * gh[:, 2 * hidden:])
        return (1.0 - z) * n + z * h_prev

    def step(i, carry):
        h_l0, h_l1 = carry
        x_t = x_ref[i].astype(jnp.float32)              # (B, F)
        h_l0 = cell(x_t, h_l0, wih0, whh0, bi0, bh0)
        h_l1 = cell(h_l0, h_l1, wih1, whh1, bi1, bh1)
        embs_ref[i] = h_l1.astype(embs_ref.dtype)       # lane-dense (B, H) store
        return (h_l0, h_l1)

    h_l0, h_l1 = jax.lax.fori_loop(0, tc, step, (h0_s[...], h1_s[...]),
                                   unroll=True)
    h0_s[...] = h_l0
    h1_s[...] = h_l1

    @pl.when(c == pl.num_programs(0) - 1)
    def _final():
        ht_ref[0] = h0_s[...].astype(ht_ref.dtype)
        ht_ref[1] = h1_s[...].astype(ht_ref.dtype)


# --------------------------------------------------------------------------
# Regressor kernel: one (T*B, H) x (H, num_out) matmul, outside the recurrence.
# --------------------------------------------------------------------------
def _regressor_kernel(e_ref, w_ref, b_ref, o_ref):
    o_ref[...] = (jnp.dot(e_ref[...], w_ref[...],
                          preferred_element_type=jnp.float32)
                  + b_ref[...]).astype(o_ref.dtype)


# --------------------------------------------------------------------------
# Wrapper
# --------------------------------------------------------------------------
def _pack_gru_layer(wih, whh, bih, bhh):
    """Per-gate (3, In, H)/(3, H, H)/(3, 1, H) -> packed (In, 3H)/(H, 3H)/(1, 3H).

    Lane order is [r | z | n]. Hidden biases of r/z are folded into the input
    bias; the hidden-side bias keeps only bhh_n (zeros elsewhere) because it
    must be multiplied by r inside the n gate.
    """
    hidden = whh.shape[-1]
    wih_p = jnp.concatenate([wih[0], wih[1], wih[2]], axis=1)
    whh_p = jnp.concatenate([whh[0], whh[1], whh[2]], axis=1)
    bi_p = jnp.concatenate([bih[0] + bhh[0], bih[1] + bhh[1], bih[2]], axis=1)
    bh_p = jnp.concatenate([jnp.zeros((1, 2 * hidden), bhh.dtype), bhh[2]], axis=1)
    return wih_p, whh_p, bi_p, bh_p


def _pick_time_chunk(T, max_chunk=32):
    """Largest divisor of T that is <= max_chunk (so chunking is exact)."""
    tc = 1
    for d in range(1, min(T, max_chunk) + 1):
        if T % d == 0:
            tc = d
    return tc


def gru_ratio_regressor(x, params, h0=None, max_time_chunk=32):
    """x: (B, T, num_feat) batch_first, like the PyTorch module.
       Returns (outs (B, T, num_out), ht (2, B, H))."""
    B, T, F = x.shape
    H = params["whh0"].shape[-1]
    num_out = params["wreg"].shape[-1]

    if h0 is None:
        h0 = jnp.zeros((2, B, H), jnp.float32)

    wih0_p, whh0_p, bi0_p, bh0_p = _pack_gru_layer(
        params["wih0"], params["whh0"], params["bih0"], params["bhh0"])
    wih1_p, whh1_p, bi1_p, bh1_p = _pack_gru_layer(
        params["wih1"], params["whh1"], params["bih1"], params["bhh1"])

    x_tm = jnp.transpose(x, (1, 0, 2))              # time-major (T, B, F)

    Tc = _pick_time_chunk(T, max_time_chunk)
    n_chunks = T // Tc

    inv2 = lambda shape: pl.BlockSpec(shape, lambda c: (0, 0))      # grid-invariant 2-D
    inv3 = lambda shape: pl.BlockSpec(shape, lambda c: (0, 0, 0))   # grid-invariant 3-D

    grid_spec = pltpu.PrefetchScalarGridSpec(
        num_scalar_prefetch=0,
        grid=(n_chunks,),
        in_specs=[
            pl.BlockSpec((Tc, B, F), lambda c: (c, 0, 0)),          # x chunk
            inv3((2, B, H)),                                        # h0
            inv2((F, 3 * H)), inv2((H, 3 * H)),                     # layer0 packed W_ih, W_hh
            inv2((1, 3 * H)), inv2((1, 3 * H)),                     # layer0 folded biases
            inv2((H, 3 * H)), inv2((H, 3 * H)),                     # layer1 packed W_ih, W_hh
            inv2((1, 3 * H)), inv2((1, 3 * H)),                     # layer1 folded biases
        ],
        out_specs=[
            pl.BlockSpec((Tc, B, H), lambda c: (c, 0, 0)),          # embs chunk (time-major)
            inv3((2, B, H)),                                        # ht
        ],
        scratch_shapes=[pltpu.VMEM((B, H), jnp.float32),            # layer0 hidden state
                        pltpu.VMEM((B, H), jnp.float32)],           # layer1 hidden state
    )

    embs_tm, ht = pl.pallas_call(
        _gru_kernel,
        grid_spec=grid_spec,
        out_shape=(
            jax.ShapeDtypeStruct((T, B, H), jnp.float32),
            jax.ShapeDtypeStruct((2, B, H), jnp.float32),
        ),
        compiler_params=pltpu.CompilerParams(
            dimension_semantics=("arbitrary",),     # time recurrence -> sequential grid
        ),
    )(x_tm, h0,
      wih0_p, whh0_p, bi0_p, bh0_p,
      wih1_p, whh1_p, bi1_p, bh1_p)

    # Regressor hoisted out of the recurrence: one lane-dense matmul.
    embs_flat = embs_tm.reshape(T * B, H)
    outs_flat = pl.pallas_call(
        _regressor_kernel,
        grid=(1,),
        in_specs=[pl.BlockSpec((T * B, H), lambda i: (0, 0)),
                  pl.BlockSpec((H, num_out), lambda i: (0, 0)),
                  pl.BlockSpec((1, num_out), lambda i: (0, 0))],
        out_specs=pl.BlockSpec((T * B, num_out), lambda i: (0, 0)),
        out_shape=jax.ShapeDtypeStruct((T * B, num_out), jnp.float32),
    )(embs_flat, params["wreg"], params["breg"])

    outs = jnp.transpose(outs_flat.reshape(T, B, num_out), (1, 0, 2))
    return outs, ht


# --------------------------------------------------------------------------
# Pure-JAX reference (matches torch.nn.GRU + Linear) for validation.
# --------------------------------------------------------------------------
def _reference(x, params, h0):
    def cell(x_t, h_prev, wih, whh, bih, bhh):
        gi_r = x_t @ wih[0] + bih[0]
        gi_z = x_t @ wih[1] + bih[1]
        gi_n = x_t @ wih[2] + bih[2]
        gh_r = h_prev @ whh[0] + bhh[0]
        gh_z = h_prev @ whh[1] + bhh[1]
        gh_n = h_prev @ whh[2] + bhh[2]
        r = jax.nn.sigmoid(gi_r + gh_r)
        z = jax.nn.sigmoid(gi_z + gh_z)
        n = jnp.tanh(gi_n + r * gh_n)
        return (1.0 - z) * n + z * h_prev

    def step(carry, x_t):
        h0_l, h1_l = carry
        h0_n = cell(x_t, h0_l, params["wih0"], params["whh0"],
                    params["bih0"], params["bhh0"])
        h1_n = cell(h0_n, h1_l, params["wih1"], params["whh1"],
                    params["bih1"], params["bhh1"])
        return (h0_n, h1_n), h1_n

    (h0_f, h1_f), embs_tm = jax.lax.scan(step, (h0[0], h0[1]),
                                         jnp.transpose(x, (1, 0, 2)))
    embs = jnp.transpose(embs_tm, (1, 0, 2))
    outs = embs @ params["wreg"] + params["breg"]
    ht = jnp.stack([h0_f, h1_f], axis=0)
    return outs, ht


def _init_params(num_feat, num_out, hidden, key):
    k = 1.0 / math.sqrt(hidden)
    keys = jax.random.split(key, 10)
    u = lambda kk, shape: jax.random.uniform(kk, shape, jnp.float32, -k, k)
    return {
        "wih0": u(keys[0], (3, num_feat, hidden)),
        "whh0": u(keys[1], (3, hidden, hidden)),
        "bih0": u(keys[2], (3, 1, hidden)),
        "bhh0": u(keys[3], (3, 1, hidden)),
        "wih1": u(keys[4], (3, hidden, hidden)),
        "whh1": u(keys[5], (3, hidden, hidden)),
        "bih1": u(keys[6], (3, 1, hidden)),
        "bhh1": u(keys[7], (3, 1, hidden)),
        "wreg": u(keys[8], (hidden, num_out)),
        "breg": u(keys[9], (1, num_out)),
    }


if __name__ == "__main__":
    B, T, num_feat, num_out, hidden = 2, 8, 4, 2, 32

    key = jax.random.PRNGKey(0)
    kx, kp = jax.random.split(key)
    x = jax.random.normal(kx, (B, T, num_feat), jnp.float32)
    params = _init_params(num_feat, num_out, hidden, kp)
    h0 = jnp.zeros((2, B, hidden), jnp.float32)

    outs, ht = jax.block_until_ready(gru_ratio_regressor(x, params, h0=None))

    outs_ref, ht_ref = _reference(x, params, h0)
    assert outs.shape == (B, T, num_out) and ht.shape == (2, B, hidden)
    assert jnp.allclose(outs, outs_ref, atol=1e-4, rtol=1e-4)
    assert jnp.allclose(ht, ht_ref, atol=1e-4, rtol=1e-4)

    print("KERNEL_OK")
</pallas_src>

<mosaic_0001>
module attributes {stable_mosaic.version = 11 : i64} {
  func.func @_gru_kernel(%arg0: i32, %arg1: memref<8x2x4xf32, #tpu.memory_space<vmem>>, %arg2: memref<2x2x32xf32, #tpu.memory_space<vmem>>, %arg3: memref<4x96xf32, #tpu.memory_space<vmem>>, %arg4: memref<32x96xf32, #tpu.memory_space<vmem>>, %arg5: memref<1x96xf32, #tpu.memory_space<vmem>>, %arg6: memref<1x96xf32, #tpu.memory_space<vmem>>, %arg7: memref<32x96xf32, #tpu.memory_space<vmem>>, %arg8: memref<32x96xf32, #tpu.memory_space<vmem>>, %arg9: memref<1x96xf32, #tpu.memory_space<vmem>>, %arg10: memref<1x96xf32, #tpu.memory_space<vmem>>, %arg11: memref<8x2x32xf32, #tpu.memory_space<vmem>>, %arg12: memref<2x2x32xf32, #tpu.memory_space<vmem>>, %arg13: memref<2x32xf32, #tpu.memory_space<vmem>>, %arg14: memref<2x32xf32, #tpu.memory_space<vmem>>) attributes {dimension_semantics = [#tpu.dimension_semantics<arbitrary>], iteration_bounds = array<i64: 1>, scalar_prefetch = 0 : i64, scratch_operands = 2 : i64, tpu.core_type = #tpu.core_type<tc>, window_params = [{transform_indices = @transform_0, window_bounds = array<i64: 8, 2, 4>}, {pipeline_mode = #tpu.pipeline_mode<synchronous>, transform_indices = @transform_1, window_bounds = array<i64: 2, 2, 32>}, {pipeline_mode = #tpu.pipeline_mode<synchronous>, transform_indices = @transform_2, window_bounds = array<i64: 4, 96>}, {pipeline_mode = #tpu.pipeline_mode<synchronous>, transform_indices = @transform_3, window_bounds = array<i64: 32, 96>}, {pipeline_mode = #tpu.pipeline_mode<synchronous>, transform_indices = @transform_4, window_bounds = array<i64: 1, 96>}, {pipeline_mode = #tpu.pipeline_mode<synchronous>, transform_indices = @transform_5, window_bounds = array<i64: 1, 96>}, {pipeline_mode = #tpu.pipeline_mode<synchronous>, transform_indices = @transform_6, window_bounds = array<i64: 32, 96>}, {pipeline_mode = #tpu.pipeline_mode<synchronous>, transform_indices = @transform_7, window_bounds = array<i64: 32, 96>}, {pipeline_mode = #tpu.pipeline_mode<synchronous>, transform_indices = @transform_8, window_bounds = array<i64: 1, 96>}, {pipeline_mode = #tpu.pipeline_mode<synchronous>, transform_indices = @transform_9, window_bounds = array<i64: 1, 96>}, {transform_indices = @transform_10, window_bounds = array<i64: 8, 2, 32>}, {pipeline_mode = #tpu.pipeline_mode<synchronous>, transform_indices = @transform_11, window_bounds = array<i64: 2, 2, 32>}]} {
    %c0_i32 = arith.constant 0 : i32
    %0 = arith.cmpi eq, %arg0, %c0_i32 : i32
    %1 = arith.extui %0 : i1 to i32
    %c0_i32_0 = arith.constant 0 : i32
    %2 = arith.cmpi ne, %1, %c0_i32_0 : i32
    scf.if %2 {
      %c0_122 = arith.constant 0 : index
      %c0_123 = arith.constant 0 : index
      %c0_124 = arith.constant 0 : index
      %490 = vector.load %arg2[%c0_122, %c0_123, %c0_124] : memref<2x2x32xf32, #tpu.memory_space<vmem>>, vector<1x2x32xf32>
      %491 = vector.shape_cast %490 : vector<1x2x32xf32> to vector<2x32xf32>
      %c0_125 = arith.constant 0 : index
      %c0_126 = arith.constant 0 : index
      %492 = vector.load %arg13[%c0_125, %c0_126] : memref<2x32xf32, #tpu.memory_space<vmem>>, vector<2x32xf32>
      tpu.vector_store %arg13[%c0_125, %c0_126], %491 {strides = array<i32>} : memref<2x32xf32, #tpu.memory_space<vmem>>, vector<2x32xf32>,
      %c1 = arith.constant 1 : index
      %c0_127 = arith.constant 0 : index
      %c0_128 = arith.constant 0 : index
      %493 = vector.load %arg2[%c1, %c0_127, %c0_128] : memref<2x2x32xf32, #tpu.memory_space<vmem>>, vector<1x2x32xf32>
      %494 = vector.shape_cast %493 : vector<1x2x32xf32> to vector<2x32xf32>
      %c0_129 = arith.constant 0 : index
      %c0_130 = arith.constant 0 : index
      %495 = vector.load %arg14[%c0_129, %c0_130] : memref<2x32xf32, #tpu.memory_space<vmem>>, vector<2x32xf32>
      tpu.vector_store %arg14[%c0_129, %c0_130], %494 {strides = array<i32>} : memref<2x32xf32, #tpu.memory_space<vmem>>, vector<2x32xf32>,
    } else {
    }
    %c0 = arith.constant 0 : index
    %c0_1 = arith.constant 0 : index
    %3 = vector.load %arg3[%c0, %c0_1] : memref<4x96xf32, #tpu.memory_space<vmem>>, vector<4x96xf32>
    %c0_2 = arith.constant 0 : index
    %c0_3 = arith.constant 0 : index
    %4 = vector.load %arg4[%c0_2, %c0_3] : memref<32x96xf32, #tpu.memory_space<vmem>>, vector<32x96xf32>
    %c0_4 = arith.constant 0 : index
    %c0_5 = arith.constant 0 : index
    %5 = vector.load %arg5[%c0_4, %c0_5] : memref<1x96xf32, #tpu.memory_space<vmem>>, vector<1x96xf32>
    %c0_6 = arith.constant 0 : index
    %c0_7 = arith.constant 0 : index
    %6 = vector.load %arg6[%c0_6, %c0_7] : memref<1x96xf32, #tpu.memory_space<vmem>>, vector<1x96xf32>
    %c0_8 = arith.constant 0 : index
    %c0_9 = arith.constant 0 : index
    %7 = vector.load %arg7[%c0_8, %c0_9] : memref<32x96xf32, #tpu.memory_space<vmem>>, vector<32x96xf32>
    %c0_10 = arith.constant 0 : index
    %c0_11 = arith.constant 0 : index
    %8 = vector.load %arg8[%c0_10, %c0_11] : memref<32x96xf32, #tpu.memory_space<vmem>>, vector<32x96xf32>
    %c0_12 = arith.constant 0 : index
    %c0_13 = arith.constant 0 : index
    %9 = vector.load %arg9[%c0_12, %c0_13] : memref<1x96xf32, #tpu.memory_space<vmem>>, vector<1x96xf32>
    %c0_14 = arith.constant 0 : index
    %c0_15 = arith.constant 0 : index
    %10 = vector.load %arg10[%c0_14, %c0_15] : memref<1x96xf32, #tpu.memory_space<vmem>>, vector<1x96xf32>
    %c0_16 = arith.constant 0 : index
    %c0_17 = arith.constant 0 : index
    %11 = vector.load %arg13[%c0_16, %c0_17] : memref<2x32xf32, #tpu.memory_space<vmem>>, vector<2x32xf32>
    %c0_18 = arith.constant 0 : index
    %c0_19 = arith.constant 0 : index
    %12 = vector.load %arg14[%c0_18, %c0_19] : memref<2x32xf32, #tpu.memory_space<vmem>>, vector<2x32xf32>
    %c0_i32_20 = arith.constant 0 : i32
    %13 = arith.index_cast %c0_i32_20 : i32 to index
    %c0_21 = arith.constant 0 : index
    %c0_22 = arith.constant 0 : index
    %14 = vector.load %arg1[%13, %c0_21, %c0_22] : memref<8x2x4xf32, #tpu.memory_space<vmem>>, vector<1x2x4xf32>
    %15 = vector.shape_cast %14 : vector<1x2x4xf32> to vector<2x4xf32>
    %cst = arith.constant dense<0.000000e+00> : vector<2x96xf32>
    %16 = tpu.matmul %15, %3, %cst {dimension_numbers = #tpu.dot_dimension_numbers<[1], [0], [0], [1], [0, 0, 1, 1], [], []>} : vector<2x4xf32>, vector<4x96xf32>, vector<2x96xf32> -> vector<2x96xf32>
    %17 = vector.broadcast %5 : vector<1x96xf32> to vector<2x96xf32>
    %18 = arith.addf %16, %17 : vector<2x96xf32>
    %cst_23 = arith.constant dense<0.000000e+00> : vector<2x96xf32>
    %19 = tpu.matmul %11, %4, %cst_23 {dimension_numbers = #tpu.dot_dimension_numbers<[1], [0], [0], [1], [0, 0, 1, 1], [], []>} : vector<2x32xf32>, vector<32x96xf32>, vector<2x96xf32> -> vector<2x96xf32>
    %20 = vector.broadcast %6 : vector<1x96xf32> to vector<2x96xf32>
    %21 = arith.addf %19, %20 : vector<2x96xf32>
    %22 = vector.extract_strided_slice %18 {offsets = [0, 0], sizes = [2, 64], strides = [1, 1]} : vector<2x96xf32> to vector<2x64xf32>
    %23 = vector.extract_strided_slice %21 {offsets = [0, 0], sizes = [2, 64], strides = [1, 1]} : vector<2x96xf32> to vector<2x64xf32>
    %24 = arith.addf %22, %23 : vector<2x64xf32>
    %25 = arith.negf %24 : vector<2x64xf32>
    %26 = math.exp %25 : vector<2x64xf32>
    %cst_24 = arith.constant 1.000000e+00 : f32
    %27 = vector.broadcast %cst_24 : f32 to vector<2x64xf32>
    %28 = arith.addf %27, %26 : vector<2x64xf32>
    %29 = arith.divf %27, %28 : vector<2x64xf32>
    %30 = vector.extract_strided_slice %29 {offsets = [0, 0], sizes = [2, 32], strides = [1, 1]} : vector<2x64xf32> to vector<2x32xf32>
    %31 = vector.extract_strided_slice %29 {offsets = [0, 32], sizes = [2, 32], strides = [1, 1]} : vector<2x64xf32> to vector<2x32xf32>
    %32 = vector.extract_strided_slice %18 {offsets = [0, 64], sizes = [2, 32], strides = [1, 1]} : vector<2x96xf32> to vector<2x32xf32>
    %33 = vector.extract_strided_slice %21 {offsets = [0, 64], sizes = [2, 32], strides = [1, 1]} : vector<2x96xf32> to vector<2x32xf32>
    %34 = arith.mulf %30, %33 : vector<2x32xf32>
    %35 = arith.addf %32, %34 : vector<2x32xf32>
    %36 = math.tanh %35 : vector<2x32xf32>
    %cst_25 = arith.constant 1.000000e+00 : f32
    %37 = vector.broadcast %cst_25 : f32 to vector<2x32xf32>
    %38 = arith.subf %37, %31 : vector<2x32xf32>
    %39 = arith.mulf %38, %36 : vector<2x32xf32>
    %40 = arith.mulf %31, %11 : vector<2x32xf32>
    %41 = arith.addf %39, %40 : vector<2x32xf32>
    %cst_26 = arith.constant dense<0.000000e+00> : vector<2x96xf32>
    %42 = tpu.matmul %41, %7, %cst_26 {dimension_numbers = #tpu.dot_dimension_numbers<[1], [0], [0], [1], [0, 0, 1, 1], [], []>} : vector<2x32xf32>, vector<32x96xf32>, vector<2x96xf32> -> vector<2x96xf32>
    %43 = vector.broadcast %9 : vector<1x96xf32> to vector<2x96xf32>
    %44 = arith.addf %42, %43 : vector<2x96xf32>
    %cst_27 = arith.constant dense<0.000000e+00> : vector<2x96xf32>
    %45 = tpu.matmul %12, %8, %cst_27 {dimension_numbers = #tpu.dot_dimension_numbers<[1], [0], [0], [1], [0, 0, 1, 1], [], []>} : vector<2x32xf32>, vector<32x96xf32>, vector<2x96xf32> -> vector<2x96xf32>
    %46 = vector.broadcast %10 : vector<1x96xf32> to vector<2x96xf32>
    %47 = arith.addf %45, %46 : vector<2x96xf32>
    %48 = vector.extract_strided_slice %44 {offsets = [0, 0], sizes = [2, 64], strides = [1, 1]} : vector<2x96xf32> to vector<2x64xf32>
    %49 = vector.extract_strided_slice %47 {offsets = [0, 0], sizes = [2, 64], strides = [1, 1]} : vector<2x96xf32> to vector<2x64xf32>
    %50 = arith.addf %48, %49 : vector<2x64xf32>
    %51 = arith.negf %50 : vector<2x64xf32>
    %52 = math.exp %51 : vector<2x64xf32>
    %cst_28 = arith.constant 1.000000e+00 : f32
    %53 = vector.broadcast %cst_28 : f32 to vector<2x64xf32>
    %54 = arith.addf %53, %52 : vector<2x64xf32>
    %55 = arith.divf %53, %54 : vector<2x64xf32>
    %56 = vector.extract_strided_slice %55 {offsets = [0, 0], sizes = [2, 32], strides = [1, 1]} : vector<2x64xf32> to vector<2x32xf32>
    %57 = vector.extract_strided_slice %55 {offsets = [0, 32], sizes = [2, 32], strides = [1, 1]} : vector<2x64xf32> to vector<2x32xf32>
    %58 = vector.extract_strided_slice %44 {offsets = [0, 64], sizes = [2, 32], strides = [1, 1]} : vector<2x96xf32> to vector<2x32xf32>
    %59 = vector.extract_strided_slice %47 {offsets = [0, 64], sizes = [2, 32], strides = [1, 1]} : vector<2x96xf32> to vector<2x32xf32>
    %60 = arith.mulf %56, %59 : vector<2x32xf32>
    %61 = arith.addf %58, %60 : vector<2x32xf32>
    %62 = math.tanh %61 : vector<2x32xf32>
    %cst_29 = arith.constant 1.000000e+00 : f32
    %63 = vector.broadcast %cst_29 : f32 to vector<2x32xf32>
    %64 = arith.subf %63, %57 : vector<2x32xf32>
    %65 = arith.mulf %64, %62 : vector<2x32xf32>
    %66 = arith.mulf %57, %12 : vector<2x32xf32>
    %67 = arith.addf %65, %66 : vector<2x32xf32>
    %68 = arith.index_cast %c0_i32_20 : i32 to index
    %c0_30 = arith.constant 0 : index
    %c0_31 = arith.constant 0 : index
    %69 = vector.load %arg11[%68, %c0_30, %c0_31] : memref<8x2x32xf32, #tpu.memory_space<vmem>>, vector<1x2x32xf32>
    %70 = vector.shape_cast %69 : vector<1x2x32xf32> to vector<2x32xf32>
    %71 = vector.shape_cast %67 : vector<2x32xf32> to vector<1x2x32xf32>
    tpu.vector_store %arg11[%68, %c0_30, %c0_31], %71 {strides = array<i32>} : memref<8x2x32xf32, #tpu.memory_space<vmem>>, vector<1x2x32xf32>,
    %c1_i32 = arith.constant 1 : i32
    %72 = arith.index_cast %c1_i32 : i32 to index
    %c0_32 = arith.constant 0 : index
    %c0_33 = arith.constant 0 : index
    %73 = vector.load %arg1[%72, %c0_32, %c0_33] : memref<8x2x4xf32, #tpu.memory_space<vmem>>, vector<1x2x4xf32>
    %74 = vector.shape_cast %73 : vector<1x2x4xf32> to vector<2x4xf32>
    %cst_34 = arith.constant dense<0.000000e+00> : vector<2x96xf32>
    %75 = tpu.matmul %74, %3, %cst_34 {dimension_numbers = #tpu.dot_dimension_numbers<[1], [0], [0], [1], [0, 0, 1, 1], [], []>} : vector<2x4xf32>, vector<4x96xf32>, vector<2x96xf32> -> vector<2x96xf32>
    %76 = vector.broadcast %5 : vector<1x96xf32> to vector<2x96xf32>
    %77 = arith.addf %75, %76 : vector<2x96xf32>
    %cst_35 = arith.constant dense<0.000000e+00> : vector<2x96xf32>
    %78 = tpu.matmul %41, %4, %cst_35 {dimension_numbers = #tpu.dot_dimension_numbers<[1], [0], [0], [1], [0, 0, 1, 1], [], []>} : vector<2x32xf32>, vector<32x96xf32>, vector<2x96xf32> -> vector<2x96xf32>
    %79 = vector.broadcast %6 : vector<1x96xf32> to vector<2x96xf32>
    %80 = arith.addf %78, %79 : vector<2x96xf32>
    %81 = vector.extract_strided_slice %77 {offsets = [0, 0], sizes = [2, 64], strides = [1, 1]} : vector<2x96xf32> to vector<2x64xf32>
    %82 = vector.extract_strided_slice %80 {offsets = [0, 0], sizes = [2, 64], strides = [1, 1]} : vector<2x96xf32> to vector<2x64xf32>
    %83 = arith.addf %81, %82 : vector<2x64xf32>
    %84 = arith.negf %83 : vector<2x64xf32>
    %85 = math.exp %84 : vector<2x64xf32>
    %cst_36 = arith.constant 1.000000e+00 : f32
    %86 = vector.broadcast %cst_36 : f32 to vector<2x64xf32>
    %87 = arith.addf %86, %85 : vector<2x64xf32>
    %88 = arith.divf %86, %87 : vector<2x64xf32>
    %89 = vector.extract_strided_slice %88 {offsets = [0, 0], sizes = [2, 32], strides = [1, 1]} : vector<2x64xf32> to vector<2x32xf32>
    %90 = vector.extract_strided_slice %88 {offsets = [0, 32], sizes = [2, 32], strides = [1, 1]} : vector<2x64xf32> to vector<2x32xf32>
    %91 = vector.extract_strided_slice %77 {offsets = [0, 64], sizes = [2, 32], strides = [1, 1]} : vector<2x96xf32> to vector<2x32xf32>
    %92 = vector.extract_strided_slice %80 {offsets = [0, 64], sizes = [2, 32], strides = [1, 1]} : vector<2x96xf32> to vector<2x32xf32>
    %93 = arith.mulf %89, %92 : vector<2x32xf32>
    %94 = arith.addf %91, %93 : vector<2x32xf32>
    %95 = math.tanh %94 : vector<2x32xf32>
    %cst_37 = arith.constant 1.000000e+00 : f32
    %96 = vector.broadcast %cst_37 : f32 to vector<2x32xf32>
    %97 = arith.subf %96, %90 : vector<2x32xf32>
    %98 = arith.mulf %97, %95 : vector<2x32xf32>
    %99 = arith.mulf %90, %41 : vector<2x32xf32>
    %100 = arith.addf %98, %99 : vector<2x32xf32>
    %cst_38 = arith.constant dense<0.000000e+00> : vector<2x96xf32>
    %101 = tpu.matmul %100, %7, %cst_38 {dimension_numbers = #tpu.dot_dimension_numbers<[1], [0], [0], [1], [0, 0, 1, 1], [], []>} : vector<2x32xf32>, vector<32x96xf32>, vector<2x96xf32> -> vector<2x96xf32>
    %102 = vector.broadcast %9 : vector<1x96xf32> to vector<2x96xf32>
    %103 = arith.addf %101, %102 : vector<2x96xf32>
    %cst_39 = arith.constant dense<0.000000e+00> : vector<2x96xf32>
    %104 = tpu.matmul %67, %8, %cst_39 {dimension_numbers = #tpu.dot_dimension_numbers<[1], [0], [0], [1], [0, 0, 1, 1], [], []>} : vector<2x32xf32>, vector<32x96xf32>, vector<2x96xf32> -> vector<2x96xf32>
    %105 = vector.broadcast %10 : vector<1x96xf32> to vector<2x96xf32>
    %106 = arith.addf %104, %105 : vector<2x96xf32>
    %107 = vector.extract_strided_slice %103 {offsets = [0, 0], sizes = [2, 64], strides = [1, 1]} : vector<2x96xf32> to vector<2x64xf32>
    %108 = vector.extract_strided_slice %106 {offsets = [0, 0], sizes = [2, 64], strides = [1, 1]} : vector<2x96xf32> to vector<2x64xf32>
    %109 = arith.addf %107, %108 : vector<2x64xf32>
    %110 = arith.negf %109 : vector<2x64xf32>
    %111 = math.exp %110 : vector<2x64xf32>
    %cst_40 = arith.constant 1.000000e+00 : f32
    %112 = vector.broadcast %cst_40 : f32 to vector<2x64xf32>
    %113 = arith.addf %112, %111 : vector<2x64xf32>
    %114 = arith.divf %112, %113 : vector<2x64xf32>
    %115 = vector.extract_strided_slice %114 {offsets = [0, 0], sizes = [2, 32], strides = [1, 1]} : vector<2x64xf32> to vector<2x32xf32>
    %116 = vector.extract_strided_slice %114 {offsets = [0, 32], sizes = [2, 32], strides = [1, 1]} : vector<2x64xf32> to vector<2x32xf32>
    %117 = vector.extract_strided_slice %103 {offsets = [0, 64], sizes = [2, 32], strides = [1, 1]} : vector<2x96xf32> to vector<2x32xf32>
    %118 = vector.extract_strided_slice %106 {offsets = [0, 64], sizes = [2, 32], strides = [1, 1]} : vector<2x96xf32> to vector<2x32xf32>
    %119 = arith.mulf %115, %118 : vector<2x32xf32>
    %120 = arith.addf %117, %119 : vector<2x32xf32>
    %121 = math.tanh %120 : vector<2x32xf32>
    %cst_41 = arith.constant 1.000000e+00 : f32
    %122 = vector.broadcast %cst_41 : f32 to vector<2x32xf32>
    %123 = arith.subf %122, %116 : vector<2x32xf32>
    %124 = arith.mulf %123, %121 : vector<2x32xf32>
    %125 = arith.mulf %116, %67 : vector<2x32xf32>
    %126 = arith.addf %124, %125 : vector<2x32xf32>
    %127 = arith.index_cast %c1_i32 : i32 to index
    %c0_42 = arith.constant 0 : index
    %c0_43 = arith.constant 0 : index
    %128 = vector.load %arg11[%127, %c0_42, %c0_43] : memref<8x2x32xf32, #tpu.memory_space<vmem>>, vector<1x2x32xf32>
    %129 = vector.shape_cast %128 : vector<1x2x32xf32> to vector<2x32xf32>
    %130 = vector.shape_cast %126 : vector<2x32xf32> to vector<1x2x32xf32>
    tpu.vector_store %arg11[%127, %c0_42, %c0_43], %130 {strides = array<i32>} : memref<8x2x32xf32, #tpu.memory_space<vmem>>, vector<1x2x32xf32>,
    %c2_i32 = arith.constant 2 : i32
    %131 = arith.index_cast %c2_i32 : i32 to index
    %c0_44 = arith.constant 0 : index
    %c0_45 = arith.constant 0 : index
    %132 = vector.load %arg1[%131, %c0_44, %c0_45] : memref<8x2x4xf32, #tpu.memory_space<vmem>>, vector<1x2x4xf32>
    %133 = vector.shape_cast %132 : vector<1x2x4xf32> to vector<2x4xf32>
    %cst_46 = arith.constant dense<0.000000e+00> : vector<2x96xf32>
    %134 = tpu.matmul %133, %3, %cst_46 {dimension_numbers = #tpu.dot_dimension_numbers<[1], [0], [0], [1], [0, 0, 1, 1], [], []>} : vector<2x4xf32>, vector<4x96xf32>, vector<2x96xf32> -> vector<2x96xf32>
    %135 = vector.broadcast %5 : vector<1x96xf32> to vector<2x96xf32>
    %136 = arith.addf %134, %135 : vector<2x96xf32>
    %cst_47 = arith.constant dense<0.000000e+00> : vector<2x96xf32>
    %137 = tpu.matmul %100, %4, %cst_47 {dimension_numbers = #tpu.dot_dimension_numbers<[1], [0], [0], [1], [0, 0, 1, 1], [], []>} : vector<2x32xf32>, vector<32x96xf32>, vector<2x96xf32> -> vector<2x96xf32>
    %138 = vector.broadcast %6 : vector<1x96xf32> to vector<2x96xf32>
    %139 = arith.addf %137, %138 : vector<2x96xf32>
    %140 = vector.extract_strided_slice %136 {offsets = [0, 0], sizes = [2, 64], strides = [1, 1]} : vector<2x96xf32> to vector<2x64xf32>
    %141 = vector.extract_strided_slice %139 {offsets = [0, 0], sizes = [2, 64], strides = [1, 1]} : vector<2x96xf32> to vector<2x64xf32>
    %142 = arith.addf %140, %141 : vector<2x64xf32>
    %143 = arith.negf %142 : vector<2x64xf32>
    %144 = math.exp %143 : vector<2x64xf32>
    %cst_48 = arith.constant 1.000000e+00 : f32
    %145 = vector.broadcast %cst_48 : f32 to vector<2x64xf32>
    %146 = arith.addf %145, %144 : vector<2x64xf32>
    %147 = arith.divf %145, %146 : vector<2x64xf32>
    %148 = vector.extract_strided_slice %147 {offsets = [0, 0], sizes = [2, 32], strides = [1, 1]} : vector<2x64xf32> to vector<2x32xf32>
    %149 = vector.extract_strided_slice %147 {offsets = [0, 32], sizes = [2, 32], strides = [1, 1]} : vector<2x64xf32> to vector<2x32xf32>
    %150 = vector.extract_strided_slice %136 {offsets = [0, 64], sizes = [2, 32], strides = [1, 1]} : vector<2x96xf32> to vector<2x32xf32>
    %151 = vector.extract_strided_slice %139 {offsets = [0, 64], sizes = [2, 32], strides = [1, 1]} : vector<2x96xf32> to vector<2x32xf32>
    %152 = arith.mulf %148, %151 : vector<2x32xf32>
    %153 = arith.addf %150, %152 : vector<2x32xf32>
    %154 = math.tanh %153 : vector<2x32xf32>
    %cst_49 = arith.constant 1.000000e+00 : f32
    %155 = vector.broadcast %cst_49 : f32 to vector<2x32xf32>
    %156 = arith.subf %155, %149 : vector<2x32xf32>
    %157 = arith.mulf %156, %154 : vector<2x32xf32>
    %158 = arith.mulf %149, %100 : vector<2x32xf32>
    %159 = arith.addf %157, %158 : vector<2x32xf32>
    %cst_50 = arith.constant dense<0.000000e+00> : vector<2x96xf32>
    %160 = tpu.matmul %159, %7, %cst_50 {dimension_numbers = #tpu.dot_dimension_numbers<[1], [0], [0], [1], [0, 0, 1, 1], [], []>} : vector<2x32xf32>, vector<32x96xf32>, vector<2x96xf32> -> vector<2x96xf32>
    %161 = vector.broadcast %9 : vector<1x96xf32> to vector<2x96xf32>
    %162 = arith.addf %160, %161 : vector<2x96xf32>
    %cst_51 = arith.constant dense<0.000000e+00> : vector<2x96xf32>
    %163 = tpu.matmul %126, %8, %cst_51 {dimension_numbers = #tpu.dot_dimension_numbers<[1], [0], [0], [1], [0, 0, 1, 1], [], []>} : vector<2x32xf32>, vector<32x96xf32>, vector<2x96xf32> -> vector<2x96xf32>
    %164 = vector.broadcast %10 : vector<1x96xf32> to vector<2x96xf32>
    %165 = arith.addf %163, %164 : vector<2x96xf32>
    %166 = vector.extract_strided_slice %162 {offsets = [0, 0], sizes = [2, 64], strides = [1, 1]} : vector<2x96xf32> to vector<2x64xf32>
    %167 = vector.extract_strided_slice %165 {offsets = [0, 0], sizes = [2, 64], strides = [1, 1]} : vector<2x96xf32> to vector<2x64xf32>
    %168 = arith.addf %166, %167 : vector<2x64xf32>
    %169 = arith.negf %168 : vector<2x64xf32>
    %170 = math.exp %169 : vector<2x64xf32>
    %cst_52 = arith.constant 1.000000e+00 : f32
    %171 = vector.broadcast %cst_52 : f32 to vector<2x64xf32>
    %172 = arith.addf %171, %170 : vector<2x64xf32>
    %173 = arith.divf %171, %172 : vector<2x64xf32>
    %174 = vector.extract_strided_slice %173 {offsets = [0, 0], sizes = [2, 32], strides = [1, 1]} : vector<2x64xf32> to vector<2x32xf32>
    %175 = vector.extract_strided_slice %173 {offsets = [0, 32], sizes = [2, 32], strides = [1, 1]} : vector<2x64xf32> to vector<2x32xf32>
    %176 = vector.extract_strided_slice %162 {offsets = [0, 64], sizes = [2, 32], strides = [1, 1]} : vector<2x96xf32> to vector<2x32xf32>
    %177 = vector.extract_strided_slice %165 {offsets = [0, 64], sizes = [2, 32], strides = [1, 1]} : vector<2x96xf32> to vector<2x32xf32>
    %178 = arith.mulf %174, %177 : vector<2x32xf32>
    %179 = arith.addf %176, %178 : vector<2x32xf32>
    %180 = math.tanh %179 : vector<2x32xf32>
    %cst_53 = arith.constant 1.000000e+00 : f32
    %181 = vector.broadcast %cst_53 : f32 to vector<2x32xf32>
    %182 = arith.subf %181, %175 : vector<2x32xf32>
    %183 = arith.mulf %182, %180 : vector<2x32xf32>
    %184 = arith.mulf %175, %126 : vector<2x32xf32>
    %185 = arith.addf %183, %184 : vector<2x32xf32>
    %186 = arith.index_cast %c2_i32 : i32 to index
    %c0_54 = arith.constant 0 : index
    %c0_55 = arith.constant 0 : index
    %187 = vector.load %arg11[%186, %c0_54, %c0_55] : memref<8x2x32xf32, #tpu.memory_space<vmem>>, vector<1x2x32xf32>
    %188 = vector.shape_cast %187 : vector<1x2x32xf32> to vector<2x32xf32>
    %189 = vector.shape_cast %185 : vector<2x32xf32> to vector<1x2x32xf32>
    tpu.vector_store %arg11[%186, %c0_54, %c0_55], %189 {strides = array<i32>} : memref<8x2x32xf32, #tpu.memory_space<vmem>>, vector<1x2x32xf32>,
    %c3_i32 = arith.constant 3 : i32
    %190 = arith.index_cast %c3_i32 : i32 to index
    %c0_56 = arith.constant 0 : index
    %c0_57 = arith.constant 0 : index
    %191 = vector.load %arg1[%190, %c0_56, %c0_57] : memref<8x2x4xf32, #tpu.memory_space<vmem>>, vector<1x2x4xf32>
    %192 = vector.shape_cast %191 : vector<1x2x4xf32> to vector<2x4xf32>
    %cst_58 = arith.constant dense<0.000000e+00> : vector<2x96xf32>
    %193 = tpu.matmul %192, %3, %cst_58 {dimension_numbers = #tpu.dot_dimension_numbers<[1], [0], [0], [1], [0, 0, 1, 1], [], []>} : vector<2x4xf32>, vector<4x96xf32>, vector<2x96xf32> -> vector<2x96xf32>
    %194 = vector.broadcast %5 : vector<1x96xf32> to vector<2x96xf32>
    %195 = arith.addf %193, %194 : vector<2x96xf32>
    %cst_59 = arith.constant dense<0.000000e+00> : vector<2x96xf32>
    %196 = tpu.matmul %159, %4, %cst_59 {dimension_numbers = #tpu.dot_dimension_numbers<[1], [0], [0], [1], [0, 0, 1, 1], [], []>} : vector<2x32xf32>, vector<32x96xf32>, vector<2x96xf32> -> vector<2x96xf32>
    %197 = vector.broadcast %6 : vector<1x96xf32> to vector<2x96xf32>
    %198 = arith.addf %196, %197 : vector<2x96xf32>
    %199 = vector.extract_strided_slice %195 {offsets = [0, 0], sizes = [2, 64], strides = [1, 1]} : vector<2x96xf32> to vector<2x64xf32>
    %200 = vector.extract_strided_slice %198 {offsets = [0, 0], sizes = [2, 64], strides = [1, 1]} : vector<2x96xf32> to vector<2x64xf32>
    %201 = arith.addf %199, %200 : vector<2x64xf32>
    %202 = arith.negf %201 : vector<2x64xf32>
    %203 = math.exp %202 : vector<2x64xf32>
    %cst_60 = arith.constant 1.000000e+00 : f32
    %204 = vector.broadcast %cst_60 : f32 to vector<2x64xf32>
    %205 = arith.addf %204, %203 : vector<2x64xf32>
    %206 = arith.divf %204, %205 : vector<2x64xf32>
    %207 = vector.extract_strided_slice %206 {offsets = [0, 0], sizes = [2, 32], strides = [1, 1]} : vector<2x64xf32> to vector<2x32xf32>
    %208 = vector.extract_strided_slice %206 {offsets = [0, 32], sizes = [2, 32], strides = [1, 1]} : vector<2x64xf32> to vector<2x32xf32>
    %209 = vector.extract_strided_slice %195 {offsets = [0, 64], sizes = [2, 32], strides = [1, 1]} : vector<2x96xf32> to vector<2x32xf32>
    %210 = vector.extract_strided_slice %198 {offsets = [0, 64], sizes = [2, 32], strides = [1, 1]} : vector<2x96xf32> to vector<2x32xf32>
    %211 = arith.mulf %207, %210 : vector<2x32xf32>
    %212 = arith.addf %209, %211 : vector<2x32xf32>
    %213 = math.tanh %212 : vector<2x32xf32>
    %cst_61 = arith.constant 1.000000e+00 : f32
    %214 = vector.broadcast %cst_61 : f32 to vector<2x32xf32>
    %215 = arith.subf %214, %208 : vector<2x32xf32>
    %216 = arith.mulf %215, %213 : vector<2x32xf32>
    %217 = arith.mulf %208, %159 : vector<2x32xf32>
    %218 = arith.addf %216, %217 : vector<2x32xf32>
    %cst_62 = arith.constant dense<0.000000e+00> : vector<2x96xf32>
    %219 = tpu.matmul %218, %7, %cst_62 {dimension_numbers = #tpu.dot_dimension_numbers<[1], [0], [0], [1], [0, 0, 1, 1], [], []>} : vector<2x32xf32>, vector<32x96xf32>, vector<2x96xf32> -> vector<2x96xf32>
    %220 = vector.broadcast %9 : vector<1x96xf32> to vector<2x96xf32>
    %221 = arith.addf %219, %220 : vector<2x96xf32>
    %cst_63 = arith.constant dense<0.000000e+00> : vector<2x96xf32>
    %222 = tpu.matmul %185, %8, %cst_63 {dimension_numbers = #tpu.dot_dimension_numbers<[1], [0], [0], [1], [0, 0, 1, 1], [], []>} : vector<2x32xf32>, vector<32x96xf32>, vector<2x96xf32> -> vector<2x96xf32>
    %223 = vector.broadcast %10 : vector<1x96xf32> to vector<2x96xf32>
    %224 = arith.addf %222, %223 : vector<2x96xf32>
    %225 = vector.extract_strided_slice %221 {offsets = [0, 0], sizes = [2, 64], strides = [1, 1]} : vector<2x96xf32> to vector<2x64xf32>
    %226 = vector.extract_strided_slice %224 {offsets = [0, 0], sizes = [2, 64], strides = [1, 1]} : vector<2x96xf32> to vector<2x64xf32>
    %227 = arith.addf %225, %226 : vector<2x64xf32>
    %228 = arith.negf %227 : vector<2x64xf32>
    %229 = math.exp %228 : vector<2x64xf32>
    %cst_64 = arith.constant 1.000000e+00 : f32
    %230 = vector.broadcast %cst_64 : f32 to vector<2x64xf32>
    %231 = arith.addf %230, %229 : vector<2x64xf32>
    %232 = arith.divf %230, %231 : vector<2x64xf32>
    %233 = vector.extract_strided_slice %232 {offsets = [0, 0], sizes = [2, 32], strides = [1, 1]} : vector<2x64xf32> to vector<2x32xf32>
    %234 = vector.extract_strided_slice %232 {offsets = [0, 32], sizes = [2, 32], strides = [1, 1]} : vector<2x64xf32> to vector<2x32xf32>
    %235 = vector.extract_strided_slice %221 {offsets = [0, 64], sizes = [2, 32], strides = [1, 1]} : vector<2x96xf32> to vector<2x32xf32>
    %236 = vector.extract_strided_slice %224 {offsets = [0, 64], sizes = [2, 32], strides = [1, 1]} : vector<2x96xf32> to vector<2x32xf32>
    %237 = arith.mulf %233, %236 : vector<2x32xf32>
    %238 = arith.addf %235, %237 : vector<2x32xf32>
    %239 = math.tanh %238 : vector<2x32xf32>
    %cst_65 = arith.constant 1.000000e+00 : f32
    %240 = vector.broadcast %cst_65 : f32 to vector<2x32xf32>
    %241 = arith.subf %240, %234 : vector<2x32xf32>
    %242 = arith.mulf %241, %239 : vector<2x32xf32>
    %243 = arith.mulf %234, %185 : vector<2x32xf32>
    %244 = arith.addf %242, %243 : vector<2x32xf32>
    %245 = arith.index_cast %c3_i32 : i32 to index
    %c0_66 = arith.constant 0 : index
    %c0_67 = arith.constant 0 : index
    %246 = vector.load %arg11[%245, %c0_66, %c0_67] : memref<8x2x32xf32, #tpu.memory_space<vmem>>, vector<1x2x32xf32>
    %247 = vector.shape_cast %246 : vector<1x2x32xf32> to vector<2x32xf32>
    %248 = vector.shape_cast %244 : vector<2x32xf32> to vector<1x2x32xf32>
    tpu.vector_store %arg11[%245, %c0_66, %c0_67], %248 {strides = array<i32>} : memref<8x2x32xf32, #tpu.memory_space<vmem>>, vector<1x2x32xf32>,
    %c4_i32 = arith.constant 4 : i32
    %249 = arith.index_cast %c4_i32 : i32 to index
    %c0_68 = arith.constant 0 : index
    %c0_69 = arith.constant 0 : index
    %250 = vector.load %arg1[%249, %c0_68, %c0_69] : memref<8x2x4xf32, #tpu.memory_space<vmem>>, vector<1x2x4xf32>
    %251 = vector.shape_cast %250 : vector<1x2x4xf32> to vector<2x4xf32>
    %cst_70 = arith.constant dense<0.000000e+00> : vector<2x96xf32>
    %252 = tpu.matmul %251, %3, %cst_70 {dimension_numbers = #tpu.dot_dimension_numbers<[1], [0], [0], [1], [0, 0, 1, 1], [], []>} : vector<2x4xf32>, vector<4x96xf32>, vector<2x96xf32> -> vector<2x96xf32>
    %253 = vector.broadcast %5 : vector<1x96xf32> to vector<2x96xf32>
    %254 = arith.addf %252, %253 : vector<2x96xf32>
    %cst_71 = arith.constant dense<0.000000e+00> : vector<2x96xf32>
    %255 = tpu.matmul %218, %4, %cst_71 {dimension_numbers = #tpu.dot_dimension_numbers<[1], [0], [0], [1], [0, 0, 1, 1], [], []>} : vector<2x32xf32>, vector<32x96xf32>, vector<2x96xf32> -> vector<2x96xf32>
    %256 = vector.broadcast %6 : vector<1x96xf32> to vector<2x96xf32>
    %257 = arith.addf %255, %256 : vector<2x96xf32>
    %258 = vector.extract_strided_slice %254 {offsets = [0, 0], sizes = [2, 64], strides = [1, 1]} : vector<2x96xf32> to vector<2x64xf32>
    %259 = vector.extract_strided_slice %257 {offsets = [0, 0], sizes = [2, 64], strides = [1, 1]} : vector<2x96xf32> to vector<2x64xf32>
    %260 = arith.addf %258, %259 : vector<2x64xf32>
    %261 = arith.negf %260 : vector<2x64xf32>
    %262 = math.exp %261 : vector<2x64xf32>
    %cst_72 = arith.constant 1.000000e+00 : f32
    %263 = vector.broadcast %cst_72 : f32 to vector<2x64xf32>
    %264 = arith.addf %263, %262 : vector<2x64xf32>
    %265 = arith.divf %263, %264 : vector<2x64xf32>
    %266 = vector.extract_strided_slice %265 {offsets = [0, 0], sizes = [2, 32], strides = [1, 1]} : vector<2x64xf32> to vector<2x32xf32>
    %267 = vector.extract_strided_slice %265 {offsets = [0, 32], sizes = [2, 32], strides = [1, 1]} : vector<2x64xf32> to vector<2x32xf32>
    %268 = vector.extract_strided_slice %254 {offsets = [0, 64], sizes = [2, 32], strides = [1, 1]} : vector<2x96xf32> to vector<2x32xf32>
    %269 = vector.extract_strided_slice %257 {offsets = [0, 64], sizes = [2, 32], strides = [1, 1]} : vector<2x96xf32> to vector<2x32xf32>
    %270 = arith.mulf %266, %269 : vector<2x32xf32>
    %271 = arith.addf %268, %270 : vector<2x32xf32>
    %272 = math.tanh %271 : vector<2x32xf32>
    %cst_73 = arith.constant 1.000000e+00 : f32
    %273 = vector.broadcast %cst_73 : f32 to vector<2x32xf32>
    %274 = arith.subf %273, %267 : vector<2x32xf32>
    %275 = arith.mulf %274, %272 : vector<2x32xf32>
    %276 = arith.mulf %267, %218 : vector<2x32xf32>
    %277 = arith.addf %275, %276 : vector<2x32xf32>
    %cst_74 = arith.constant dense<0.000000e+00> : vector<2x96xf32>
    %278 = tpu.matmul %277, %7, %cst_74 {dimension_numbers = #tpu.dot_dimension_numbers<[1], [0], [0], [1], [0, 0, 1, 1], [], []>} : vector<2x32xf32>, vector<32x96xf32>, vector<2x96xf32> -> vector<2x96xf32>
    %279 = vector.broadcast %9 : vector<1x96xf32> to vector<2x96xf32>
    %280 = arith.addf %278, %279 : vector<2x96xf32>
    %cst_75 = arith.constant dense<0.000000e+00> : vector<2x96xf32>
    %281 = tpu.matmul %244, %8, %cst_75 {dimension_numbers = #tpu.dot_dimension_numbers<[1], [0], [0], [1], [0, 0, 1, 1], [], []>} : vector<2x32xf32>, vector<32x96xf32>, vector<2x96xf32> -> vector<2x96xf32>
    %282 = vector.broadcast %10 : vector<1x96xf32> to vector<2x96xf32>
    %283 = arith.addf %281, %282 : vector<2x96xf32>
    %284 = vector.extract_strided_slice %280 {offsets = [0, 0], sizes = [2, 64], strides = [1, 1]} : vector<2x96xf32> to vector<2x64xf32>
    %285 = vector.extract_strided_slice %283 {offsets = [0, 0], sizes = [2, 64], strides = [1, 1]} : vector<2x96xf32> to vector<2x64xf32>
    %286 = arith.addf %284, %285 : vector<2x64xf32>
    %287 = arith.negf %286 : vector<2x64xf32>
    %288 = math.exp %287 : vector<2x64xf32>
    %cst_76 = arith.constant 1.000000e+00 : f32
    %289 = vector.broadcast %cst_76 : f32 to vector<2x64xf32>
    %290 = arith.addf %289, %288 : vector<2x64xf32>
    %291 = arith.divf %289, %290 : vector<2x64xf32>
    %292 = vector.extract_strided_slice %291 {offsets = [0, 0], sizes = [2, 32], strides = [1, 1]} : vector<2x64xf32> to vector<2x32xf32>
    %293 = vector.extract_strided_slice %291 {offsets = [0, 32], sizes = [2, 32], strides = [1, 1]} : vector<2x64xf32> to vector<2x32xf32>
    %294 = vector.extract_strided_slice %280 {offsets = [0, 64], sizes = [2, 32], strides = [1, 1]} : vector<2x96xf32> to vector<2x32xf32>
    %295 = vector.extract_strided_slice %283 {offsets = [0, 64], sizes = [2, 32], strides = [1, 1]} : vector<2x96xf32> to vector<2x32xf32>
    %296 = arith.mulf %292, %295 : vector<2x32xf32>
    %297 = arith.addf %294, %296 : vector<2x32xf32>
    %298 = math.tanh %297 : vector<2x32xf32>
    %cst_77 = arith.constant 1.000000e+00 : f32
    %299 = vector.broadcast %cst_77 : f32 to vector<2x32xf32>
    %300 = arith.subf %299, %293 : vector<2x32xf32>
    %301 = arith.mulf %300, %298 : vector<2x32xf32>
    %302 = arith.mulf %293, %244 : vector<2x32xf32>
    %303 = arith.addf %301, %302 : vector<2x32xf32>
    %304 = arith.index_cast %c4_i32 : i32 to index
    %c0_78 = arith.constant 0 : index
    %c0_79 = arith.constant 0 : index
    %305 = vector.load %arg11[%304, %c0_78, %c0_79] : memref<8x2x32xf32, #tpu.memory_space<vmem>>, vector<1x2x32xf32>
    %306 = vector.shape_cast %305 : vector<1x2x32xf32> to vector<2x32xf32>
    %307 = vector.shape_cast %303 : vector<2x32xf32> to vector<1x2x32xf32>
    tpu.vector_store %arg11[%304, %c0_78, %c0_79], %307 {strides = array<i32>} : memref<8x2x32xf32, #tpu.memory_space<vmem>>, vector<1x2x32xf32>,
    %c5_i32 = arith.constant 5 : i32
    %308 = arith.index_cast %c5_i32 : i32 to index
    %c0_80 = arith.constant 0 : index
    %c0_81 = arith.constant 0 : index
    %309 = vector.load %arg1[%308, %c0_80, %c0_81] : memref<8x2x4xf32, #tpu.memory_space<vmem>>, vector<1x2x4xf32>
    %310 = vector.shape_cast %309 : vector<1x2x4xf32> to vector<2x4xf32>
    %cst_82 = arith.constant dense<0.000000e+00> : vector<2x96xf32>
    %311 = tpu.matmul %310, %3, %cst_82 {dimension_numbers = #tpu.dot_dimension_numbers<[1], [0], [0], [1], [0, 0, 1, 1], [], []>} : vector<2x4xf32>, vector<4x96xf32>, vector<2x96xf32> -> vector<2x96xf32>
    %312 = vector.broadcast %5 : vector<1x96xf32> to vector<2x96xf32>
    %313 = arith.addf %311, %312 : vector<2x96xf32>
    %cst_83 = arith.constant dense<0.000000e+00> : vector<2x96xf32>
    %314 = tpu.matmul %277, %4, %cst_83 {dimension_numbers = #tpu.dot_dimension_numbers<[1], [0], [0], [1], [0, 0, 1, 1], [], []>} : vector<2x32xf32>, vector<32x96xf32>, vector<2x96xf32> -> vector<2x96xf32>
    %315 = vector.broadcast %6 : vector<1x96xf32> to vector<2x96xf32>
    %316 = arith.addf %314, %315 : vector<2x96xf32>
    %317 = vector.extract_strided_slice %313 {offsets = [0, 0], sizes = [2, 64], strides = [1, 1]} : vector<2x96xf32> to vector<2x64xf32>
    %318 = vector.extract_strided_slice %316 {offsets = [0, 0], sizes = [2, 64], strides = [1, 1]} : vector<2x96xf32> to vector<2x64xf32>
    %319 = arith.addf %317, %318 : vector<2x64xf32>
    %320 = arith.negf %319 : vector<2x64xf32>
    %321 = math.exp %320 : vector<2x64xf32>
    %cst_84 = arith.constant 1.000000e+00 : f32
    %322 = vector.broadcast %cst_84 : f32 to vector<2x64xf32>
    %323 = arith.addf %322, %321 : vector<2x64xf32>
    %324 = arith.divf %322, %323 : vector<2x64xf32>
    %325 = vector.extract_strided_slice %324 {offsets = [0, 0], sizes = [2, 32], strides = [1, 1]} : vector<2x64xf32> to vector<2x32xf32>
    %326 = vector.extract_strided_slice %324 {offsets = [0, 32], sizes = [2, 32], strides = [1, 1]} : vector<2x64xf32> to vector<2x32xf32>
    %327 = vector.extract_strided_slice %313 {offsets = [0, 64], sizes = [2, 32], strides = [1, 1]} : vector<2x96xf32> to vector<2x32xf32>
    %328 = vector.extract_strided_slice %316 {offsets = [0, 64], sizes = [2, 32], strides = [1, 1]} : vector<2x96xf32> to vector<2x32xf32>
    %329 = arith.mulf %325, %328 : vector<2x32xf32>
    %330 = arith.addf %327, %329 : vector<2x32xf32>
    %331 = math.tanh %330 : vector<2x32xf32>
    %cst_85 = arith.constant 1.000000e+00 : f32
    %332 = vector.broadcast %cst_85 : f32 to vector<2x32xf32>
    %333 = arith.subf %332, %326 : vector<2x32xf32>
    %334 = arith.mulf %333, %331 : vector<2x32xf32>
    %335 = arith.mulf %326, %277 : vector<2x32xf32>
    %336 = arith.addf %334, %335 : vector<2x32xf32>
    %cst_86 = arith.constant dense<0.000000e+00> : vector<2x96xf32>
    %337 = tpu.matmul %336, %7, %cst_86 {dimension_numbers = #tpu.dot_dimension_numbers<[1], [0], [0], [1], [0, 0, 1, 1], [], []>} : vector<2x32xf32>, vector<32x96xf32>, vector<2x96xf32> -> vector<2x96xf32>
    %338 = vector.broadcast %9 : vector<1x96xf32> to vector<2x96xf32>
    %339 = arith.addf %337, %338 : vector<2x96xf32>
    %cst_87 = arith.constant dense<0.000000e+00> : vector<2x96xf32>
    %340 = tpu.matmul %303, %8, %cst_87 {dimension_numbers = #tpu.dot_dimension_numbers<[1], [0], [0], [1], [0, 0, 1, 1], [], []>} : vector<2x32xf32>, vector<32x96xf32>, vector<2x96xf32> -> vector<2x96xf32>
    %341 = vector.broadcast %10 : vector<1x96xf32> to vector<2x96xf32>
    %342 = arith.addf %340, %341 : vector<2x96xf32>
    %343 = vector.extract_strided_slice %339 {offsets = [0, 0], sizes = [2, 64], strides = [1, 1]} : vector<2x96xf32> to vector<2x64xf32>
    %344 = vector.extract_strided_slice %342 {offsets = [0, 0], sizes = [2, 64], strides = [1, 1]} : vector<2x96xf32> to vector<2x64xf32>
    %345 = arith.addf %343, %344 : vector<2x64xf32>
    %346 = arith.negf %345 : vector<2x64xf32>
    %347 = math.exp %346 : vector<2x64xf32>
    %cst_88 = arith.constant 1.000000e+00 : f32
    %348 = vector.broadcast %cst_88 : f32 to vector<2x64xf32>
    %349 = arith.addf %348, %347 : vector<2x64xf32>
    %350 = arith.divf %348, %349 : vector<2x64xf32>
    %351 = vector.extract_strided_slice %350 {offsets = [0, 0], sizes = [2, 32], strides = [1, 1]} : vector<2x64xf32> to vector<2x32xf32>
    %352 = vector.extract_strided_slice %350 {offsets = [0, 32], sizes = [2, 32], strides = [1, 1]} : vector<2x64xf32> to vector<2x32xf32>
    %353 = vector.extract_strided_slice %339 {offsets = [0, 64], sizes = [2, 32], strides = [1, 1]} : vector<2x96xf32> to vector<2x32xf32>
    %354 = vector.extract_strided_slice %342 {offsets = [0, 64], sizes = [2, 32], strides = [1, 1]} : vector<2x96xf32> to vector<2x32xf32>
    %355 = arith.mulf %351, %354 : vector<2x32xf32>
    %356 = arith.addf %353, %355 : vector<2x32xf32>
    %357 = math.tanh %356 : vector<2x32xf32>
    %cst_89 = arith.constant 1.000000e+00 : f32
    %358 = vector.broadcast %cst_89 : f32 to vector<2x32xf32>
    %359 = arith.subf %358, %352 : vector<2x32xf32>
    %360 = arith.mulf %359, %357 : vector<2x32xf32>
    %361 = arith.mulf %352, %303 : vector<2x32xf32>
    %362 = arith.addf %360, %361 : vector<2x32xf32>
    %363 = arith.index_cast %c5_i32 : i32 to index
    %c0_90 = arith.constant 0 : index
    %c0_91 = arith.constant 0 : index
    %364 = vector.load %arg11[%363, %c0_90, %c0_91] : memref<8x2x32xf32, #tpu.memory_space<vmem>>, vector<1x2x32xf32>
    %365 = vector.shape_cast %364 : vector<1x2x32xf32> to vector<2x32xf32>
    %366 = vector.shape_cast %362 : vector<2x32xf32> to vector<1x2x32xf32>
    tpu.vector_store %arg11[%363, %c0_90, %c0_91], %366 {strides = array<i32>} : memref<8x2x32xf32, #tpu.memory_space<vmem>>, vector<1x2x32xf32>,
    %c6_i32 = arith.constant 6 : i32
    %367 = arith.index_cast %c6_i32 : i32 to index
    %c0_92 = arith.constant 0 : index
    %c0_93 = arith.constant 0 : index
    %368 = vector.load %arg1[%367, %c0_92, %c0_93] : memref<8x2x4xf32, #tpu.memory_space<vmem>>, vector<1x2x4xf32>
    %369 = vector.shape_cast %368 : vector<1x2x4xf32> to vector<2x4xf32>
    %cst_94 = arith.constant dense<0.000000e+00> : vector<2x96xf32>
    %370 = tpu.matmul %369, %3, %cst_94 {dimension_numbers = #tpu.dot_dimension_numbers<[1], [0], [0], [1], [0, 0, 1, 1], [], []>} : vector<2x4xf32>, vector<4x96xf32>, vector<2x96xf32> -> vector<2x96xf32>
    %371 = vector.broadcast %5 : vector<1x96xf32> to vector<2x96xf32>
    %372 = arith.addf %370, %371 : vector<2x96xf32>
    %cst_95 = arith.constant dense<0.000000e+00> : vector<2x96xf32>
    %373 = tpu.matmul %336, %4, %cst_95 {dimension_numbers = #tpu.dot_dimension_numbers<[1], [0], [0], [1], [0, 0, 1, 1], [], []>} : vector<2x32xf32>, vector<32x96xf32>, vector<2x96xf32> -> vector<2x96xf32>
    %374 = vector.broadcast %6 : vector<1x96xf32> to vector<2x96xf32>
    %375 = arith.addf %373, %374 : vector<2x96xf32>
    %376 = vector.extract_strided_slice %372 {offsets = [0, 0], sizes = [2, 64], strides = [1, 1]} : vector<2x96xf32> to vector<2x64xf32>
    %377 = vector.extract_strided_slice %375 {offsets = [0, 0], sizes = [2, 64], strides = [1, 1]} : vector<2x96xf32> to vector<2x64xf32>
    %378 = arith.addf %376, %377 : vector<2x64xf32>
    %379 = arith.negf %378 : vector<2x64xf32>
    %380 = math.exp %379 : vector<2x64xf32>
    %cst_96 = arith.constant 1.000000e+00 : f32
    %381 = vector.broadcast %cst_96 : f32 to vector<2x64xf32>
    %382 = arith.addf %381, %380 : vector<2x64xf32>
    %383 = arith.divf %381, %382 : vector<2x64xf32>
    %384 = vector.extract_strided_slice %383 {offsets = [0, 0], sizes = [2, 32], strides = [1, 1]} : vector<2x64xf32> to vector<2x32xf32>
    %385 = vector.extract_strided_slice %383 {offsets = [0, 32], sizes = [2, 32], strides = [1, 1]} : vector<2x64xf32> to vector<2x32xf32>
    %386 = vector.extract_strided_slice %372 {offsets = [0, 64], sizes = [2, 32], strides = [1, 1]} : vector<2x96xf32> to vector<2x32xf32>
    %387 = vector.extract_strided_slice %375 {offsets = [0, 64], sizes = [2, 32], strides = [1, 1]} : vector<2x96xf32> to vector<2x32xf32>
    %388 = arith.mulf %384, %387 : vector<2x32xf32>
    %389 = arith.addf %386, %388 : vector<2x32xf32>
    %390 = math.tanh %389 : vector<2x32xf32>
    %cst_97 = arith.constant 1.000000e+00 : f32
    %391 = vector.broadcast %cst_97 : f32 to vector<2x32xf32>
    %392 = arith.subf %391, %385 : vector<2x32xf32>
    %393 = arith.mulf %392, %390 : vector<2x32xf32>
    %394 = arith.mulf %385, %336 : vector<2x32xf32>
    %395 = arith.addf %393, %394 : vector<2x32xf32>
    %cst_98 = arith.constant dense<0.000000e+00> : vector<2x96xf32>
    %396 = tpu.matmul %395, %7, %cst_98 {dimension_numbers = #tpu.dot_dimension_numbers<[1], [0], [0], [1], [0, 0, 1, 1], [], []>} : vector<2x32xf32>, vector<32x96xf32>, vector<2x96xf32> -> vector<2x96xf32>
    %397 = vector.broadcast %9 : vector<1x96xf32> to vector<2x96xf32>
    %398 = arith.addf %396, %397 : vector<2x96xf32>
    %cst_99 = arith.constant dense<0.000000e+00> : vector<2x96xf32>
    %399 = tpu.matmul %362, %8, %cst_99 {dimension_numbers = #tpu.dot_dimension_numbers<[1], [0], [0], [1], [0, 0, 1, 1], [], []>} : vector<2x32xf32>, vector<32x96xf32>, vector<2x96xf32> -> vector<2x96xf32>
    %400 = vector.broadcast %10 : vector<1x96xf32> to vector<2x96xf32>
    %401 = arith.addf %399, %400 : vector<2x96xf32>
    %402 = vector.extract_strided_slice %398 {offsets = [0, 0], sizes = [2, 64], strides = [1, 1]} : vector<2x96xf32> to vector<2x64xf32>
    %403 = vector.extract_strided_slice %401 {offsets = [0, 0], sizes = [2, 64], strides = [1, 1]} : vector<2x96xf32> to vector<2x64xf32>
    %404 = arith.addf %402, %403 : vector<2x64xf32>
    %405 = arith.negf %404 : vector<2x64xf32>
    %406 = math.exp %405 : vector<2x64xf32>
    %cst_100 = arith.constant 1.000000e+00 : f32
    %407 = vector.broadcast %cst_100 : f32 to vector<2x64xf32>
    %408 = arith.addf %407, %406 : vector<2x64xf32>
    %409 = arith.divf %407, %408 : vector<2x64xf32>
    %410 = vector.extract_strided_slice %409 {offsets = [0, 0], sizes = [2, 32], strides = [1, 1]} : vector<2x64xf32> to vector<2x32xf32>
    %411 = vector.extract_strided_slice %409 {offsets = [0, 32], sizes = [2, 32], strides = [1, 1]} : vector<2x64xf32> to vector<2x32xf32>
    %412 = vector.extract_strided_slice %398 {offsets = [0, 64], sizes = [2, 32], strides = [1, 1]} : vector<2x96xf32> to vector<2x32xf32>
    %413 = vector.extract_strided_slice %401 {offsets = [0, 64], sizes = [2, 32], strides = [1, 1]} : vector<2x96xf32> to vector<2x32xf32>
    %414 = arith.mulf %410, %413 : vector<2x32xf32>
    %415 = arith.addf %412, %414 : vector<2x32xf32>
    %416 = math.tanh %415 : vector<2x32xf32>
    %cst_101 = arith.constant 1.000000e+00 : f32
    %417 = vector.broadcast %cst_101 : f32 to vector<2x32xf32>
    %418 = arith.subf %417, %411 : vector<2x32xf32>
    %419 = arith.mulf %418, %416 : vector<2x32xf32>
    %420 = arith.mulf %411, %362 : vector<2x32xf32>
    %421 = arith.addf %419, %420 : vector<2x32xf32>
    %422 = arith.index_cast %c6_i32 : i32 to index
    %c0_102 = arith.constant 0 : index
    %c0_103 = arith.constant 0 : index
    %423 = vector.load %arg11[%422, %c0_102, %c0_103] : memref<8x2x32xf32, #tpu.memory_space<vmem>>, vector<1x2x32xf32>
    %424 = vector.shape_cast %423 : vector<1x2x32xf32> to vector<2x32xf32>
    %425 = vector.shape_cast %421 : vector<2x32xf32> to vector<1x2x32xf32>
    tpu.vector_store %arg11[%422, %c0_102, %c0_103], %425 {strides = array<i32>} : memref<8x2x32xf32, #tpu.memory_space<vmem>>, vector<1x2x32xf32>,
    %c7_i32 = arith.constant 7 : i32
    %426 = arith.index_cast %c7_i32 : i32 to index
    %c0_104 = arith.constant 0 : index
    %c0_105 = arith.constant 0 : index
    %427 = vector.load %arg1[%426, %c0_104, %c0_105] : memref<8x2x4xf32, #tpu.memory_space<vmem>>, vector<1x2x4xf32>
    %428 = vector.shape_cast %427 : vector<1x2x4xf32> to vector<2x4xf32>
    %cst_106 = arith.constant dense<0.000000e+00> : vector<2x96xf32>
    %429 = tpu.matmul %428, %3, %cst_106 {dimension_numbers = #tpu.dot_dimension_numbers<[1], [0], [0], [1], [0, 0, 1, 1], [], []>} : vector<2x4xf32>, vector<4x96xf32>, vector<2x96xf32> -> vector<2x96xf32>
    %430 = vector.broadcast %5 : vector<1x96xf32> to vector<2x96xf32>
    %431 = arith.addf %429, %430 : vector<2x96xf32>
    %cst_107 = arith.constant dense<0.000000e+00> : vector<2x96xf32>
    %432 = tpu.matmul %395, %4, %cst_107 {dimension_numbers = #tpu.dot_dimension_numbers<[1], [0], [0], [1], [0, 0, 1, 1], [], []>} : vector<2x32xf32>, vector<32x96xf32>, vector<2x96xf32> -> vector<2x96xf32>
    %433 = vector.broadcast %6 : vector<1x96xf32> to vector<2x96xf32>
    %434 = arith.addf %432, %433 : vector<2x96xf32>
    %435 = vector.extract_strided_slice %431 {offsets = [0, 0], sizes = [2, 64], strides = [1, 1]} : vector<2x96xf32> to vector<2x64xf32>
    %436 = vector.extract_strided_slice %434 {offsets = [0, 0], sizes = [2, 64], strides = [1, 1]} : vector<2x96xf32> to vector<2x64xf32>
    %437 = arith.addf %435, %436 : vector<2x64xf32>
    %438 = arith.negf %437 : vector<2x64xf32>
    %439 = math.exp %438 : vector<2x64xf32>
    %cst_108 = arith.constant 1.000000e+00 : f32
    %440 = vector.broadcast %cst_108 : f32 to vector<2x64xf32>
    %441 = arith.addf %440, %439 : vector<2x64xf32>
    %442 = arith.divf %440, %441 : vector<2x64xf32>
    %443 = vector.extract_strided_slice %442 {offsets = [0, 0], sizes = [2, 32], strides = [1, 1]} : vector<2x64xf32> to vector<2x32xf32>
    %444 = vector.extract_strided_slice %442 {offsets = [0, 32], sizes = [2, 32], strides = [1, 1]} : vector<2x64xf32> to vector<2x32xf32>
    %445 = vector.extract_strided_slice %431 {offsets = [0, 64], sizes = [2, 32], strides = [1, 1]} : vector<2x96xf32> to vector<2x32xf32>
    %446 = vector.extract_strided_slice %434 {offsets = [0, 64], sizes = [2, 32], strides = [1, 1]} : vector<2x96xf32> to vector<2x32xf32>
    %447 = arith.mulf %443, %446 : vector<2x32xf32>
    %448 = arith.addf %445, %447 : vector<2x32xf32>
    %449 = math.tanh %448 : vector<2x32xf32>
    %cst_109 = arith.constant 1.000000e+00 : f32
    %450 = vector.broadcast %cst_109 : f32 to vector<2x32xf32>
    %451 = arith.subf %450, %444 : vector<2x32xf32>
    %452 = arith.mulf %451, %449 : vector<2x32xf32>
    %453 = arith.mulf %444, %395 : vector<2x32xf32>
    %454 = arith.addf %452, %453 : vector<2x32xf32>
    %cst_110 = arith.constant dense<0.000000e+00> : vector<2x96xf32>
    %455 = tpu.matmul %454, %7, %cst_110 {dimension_numbers = #tpu.dot_dimension_numbers<[1], [0], [0], [1], [0, 0, 1, 1], [], []>} : vector<2x32xf32>, vector<32x96xf32>, vector<2x96xf32> -> vector<2x96xf32>
    %456 = vector.broadcast %9 : vector<1x96xf32> to vector<2x96xf32>
    %457 = arith.addf %455, %456 : vector<2x96xf32>
    %cst_111 = arith.constant dense<0.000000e+00> : vector<2x96xf32>
    %458 = tpu.matmul %421, %8, %cst_111 {dimension_numbers = #tpu.dot_dimension_numbers<[1], [0], [0], [1], [0, 0, 1, 1], [], []>} : vector<2x32xf32>, vector<32x96xf32>, vector<2x96xf32> -> vector<2x96xf32>
    %459 = vector.broadcast %10 : vector<1x96xf32> to vector<2x96xf32>
    %460 = arith.addf %458, %459 : vector<2x96xf32>
    %461 = vector.extract_strided_slice %457 {offsets = [0, 0], sizes = [2, 64], strides = [1, 1]} : vector<2x96xf32> to vector<2x64xf32>
    %462 = vector.extract_strided_slice %460 {offsets = [0, 0], sizes = [2, 64], strides = [1, 1]} : vector<2x96xf32> to vector<2x64xf32>
    %463 = arith.addf %461, %462 : vector<2x64xf32>
    %464 = arith.negf %463 : vector<2x64xf32>
    %465 = math.exp %464 : vector<2x64xf32>
    %cst_112 = arith.constant 1.000000e+00 : f32
    %466 = vector.broadcast %cst_112 : f32 to vector<2x64xf32>
    %467 = arith.addf %466, %465 : vector<2x64xf32>
    %468 = arith.divf %466, %467 : vector<2x64xf32>
    %469 = vector.extract_strided_slice %468 {offsets = [0, 0], sizes = [2, 32], strides = [1, 1]} : vector<2x64xf32> to vector<2x32xf32>
    %470 = vector.extract_strided_slice %468 {offsets = [0, 32], sizes = [2, 32], strides = [1, 1]} : vector<2x64xf32> to vector<2x32xf32>
    %471 = vector.extract_strided_slice %457 {offsets = [0, 64], sizes = [2, 32], strides = [1, 1]} : vector<2x96xf32> to vector<2x32xf32>
    %472 = vector.extract_strided_slice %460 {offsets = [0, 64], sizes = [2, 32], strides = [1, 1]} : vector<2x96xf32> to vector<2x32xf32>
    %473 = arith.mulf %469, %472 : vector<2x32xf32>
    %474 = arith.addf %471, %473 : vector<2x32xf32>
    %475 = math.tanh %474 : vector<2x32xf32>
    %cst_113 = arith.constant 1.000000e+00 : f32
    %476 = vector.broadcast %cst_113 : f32 to vector<2x32xf32>
    %477 = arith.subf %476, %470 : vector<2x32xf32>
    %478 = arith.mulf %477, %475 : vector<2x32xf32>
    %479 = arith.mulf %470, %421 : vector<2x32xf32>
    %480 = arith.addf %478, %479 : vector<2x32xf32>
    %481 = arith.index_cast %c7_i32 : i32 to index
    %c0_114 = arith.constant 0 : index
    %c0_115 = arith.constant 0 : index
    %482 = vector.load %arg11[%481, %c0_114, %c0_115] : memref<8x2x32xf32, #tpu.memory_space<vmem>>, vector<1x2x32xf32>
    %483 = vector.shape_cast %482 : vector<1x2x32xf32> to vector<2x32xf32>
    %484 = vector.shape_cast %480 : vector<2x32xf32> to vector<1x2x32xf32>
    tpu.vector_store %arg11[%481, %c0_114, %c0_115], %484 {strides = array<i32>} : memref<8x2x32xf32, #tpu.memory_space<vmem>>, vector<1x2x32xf32>,
    %c8_i32 = arith.constant 8 : i32
    %c0_116 = arith.constant 0 : index
    %c0_117 = arith.constant 0 : index
    %485 = vector.load %arg13[%c0_116, %c0_117] : memref<2x32xf32, #tpu.memory_space<vmem>>, vector<2x32xf32>
    tpu.vector_store %arg13[%c0_116, %c0_117], %454 {strides = array<i32>} : memref<2x32xf32, #tpu.memory_space<vmem>>, vector<2x32xf32>,
    %c0_118 = arith.constant 0 : index
    %c0_119 = arith.constant 0 : index
    %486 = vector.load %arg14[%c0_118, %c0_119] : memref<2x32xf32, #tpu.memory_space<vmem>>, vector<2x32xf32>
    tpu.vector_store %arg14[%c0_118, %c0_119], %480 {strides = array<i32>} : memref<2x32xf32, #tpu.memory_space<vmem>>, vector<2x32xf32>,
    %c0_i32_120 = arith.constant 0 : i32
    %487 = arith.cmpi eq, %arg0, %c0_i32_120 : i32
    %488 = arith.extui %487 : i1 to i32
    %c0_i32_121 = arith.constant 0 : i32
    %489 = arith.cmpi ne, %488, %c0_i32_121 : i32
    scf.if %489 {
      %c0_122 = arith.constant 0 : index
      %c0_123 = arith.constant 0 : index
      %490 = vector.load %arg13[%c0_122, %c0_123] : memref<2x32xf32, #tpu.memory_space<vmem>>, vector<2x32xf32>
      %c0_124 = arith.constant 0 : index
      %c0_125 = arith.constant 0 : index
      %c0_126 = arith.constant 0 : index
      %491 = vector.load %arg12[%c0_124, %c0_125, %c0_126] : memref<2x2x32xf32, #tpu.memory_space<vmem>>, vector<1x2x32xf32>
      %492 = vector.shape_cast %491 : vector<1x2x32xf32> to vector<2x32xf32>
      %493 = vector.shape_cast %490 : vector<2x32xf32> to vector<1x2x32xf32>
      tpu.vector_store %arg12[%c0_124, %c0_125, %c0_126], %493 {strides = array<i32>} : memref<2x2x32xf32, #tpu.memory_space<vmem>>, vector<1x2x32xf32>,
      %c0_127 = arith.constant 0 : index
      %c0_128 = arith.constant 0 : index
      %494 = vector.load %arg14[%c0_127, %c0_128] : memref<2x32xf32, #tpu.memory_space<vmem>>, vector<2x32xf32>
      %c1 = arith.constant 1 : index
      %c0_129 = arith.constant 0 : index
      %c0_130 = arith.constant 0 : index
      %495 = vector.load %arg12[%c1, %c0_129, %c0_130] : memref<2x2x32xf32, #tpu.memory_space<vmem>>, vector<1x2x32xf32>
      %496 = vector.shape_cast %495 : vector<1x2x32xf32> to vector<2x32xf32>
      %497 = vector.shape_cast %494 : vector<2x32xf32> to vector<1x2x32xf32>
      tpu.vector_store %arg12[%c1, %c0_129, %c0_130], %497 {strides = array<i32>} : memref<2x2x32xf32, #tpu.memory_space<vmem>>, vector<1x2x32xf32>,
    } else {
    }
    return
  }
  func.func @transform_0(%arg0: i32) -> (i32, i32, i32) {
    %c0_i32 = arith.constant 0 : i32
    %c0_i32_0 = arith.constant 0 : i32
    %c0_i32_1 = arith.constant 0 : i32
    return %arg0, %c0_i32, %c0_i32_0 : i32, i32, i32
  }
  func.func @transform_1(%arg0: i32) -> (i32, i32, i32) {
    %c0_i32 = arith.constant 0 : i32
    %c0_i32_0 = arith.constant 0 : i32
    %c0_i32_1 = arith.constant 0 : i32
    %c0_i32_2 = arith.constant 0 : i32
    return %c0_i32, %c0_i32_0, %c0_i32_1 : i32, i32, i32
  }
  func.func @transform_2(%arg0: i32) -> (i32, i32) {
    %c0_i32 = arith.constant 0 : i32
    %c0_i32_0 = arith.constant 0 : i32
    %c0_i32_1 = arith.constant 0 : i32
    return %c0_i32, %c0_i32_0 : i32, i32
  }
  func.func @transform_3(%arg0: i32) -> (i32, i32) {
    %c0_i32 = arith.constant 0 : i32
    %c0_i32_0 = arith.constant 0 : i32
    %c0_i32_1 = arith.constant 0 : i32
    return %c0_i32, %c0_i32_0 : i32, i32
  }
  func.func @transform_4(%arg0: i32) -> (i32, i32) {
    %c0_i32 = arith.constant 0 : i32
    %c0_i32_0 = arith.constant 0 : i32
    %c0_i32_1 = arith.constant 0 : i32
    return %c0_i32, %c0_i32_0 : i32, i32
  }
  func.func @transform_5(%arg0: i32) -> (i32, i32) {
    %c0_i32 = arith.constant 0 : i32
    %c0_i32_0 = arith.constant 0 : i32
    %c0_i32_1 = arith.constant 0 : i32
    return %c0_i32, %c0_i32_0 : i32, i32
  }
  func.func @transform_6(%arg0: i32) -> (i32, i32) {
    %c0_i32 = arith.constant 0 : i32
    %c0_i32_0 = arith.constant 0 : i32
    %c0_i32_1 = arith.constant 0 : i32
    return %c0_i32, %c0_i32_0 : i32, i32
  }
  func.func @transform_7(%arg0: i32) -> (i32, i32) {
    %c0_i32 = arith.constant 0 : i32
    %c0_i32_0 = arith.constant 0 : i32
    %c0_i32_1 = arith.constant 0 : i32
    return %c0_i32, %c0_i32_0 : i32, i32
  }
  func.func @transform_8(%arg0: i32) -> (i32, i32) {
    %c0_i32 = arith.constant 0 : i32
    %c0_i32_0 = arith.constant 0 : i32
    %c0_i32_1 = arith.constant 0 : i32
    return %c0_i32, %c0_i32_0 : i32, i32
  }
  func.func @transform_9(%arg0: i32) -> (i32, i32) {
    %c0_i32 = arith.constant 0 : i32
    %c0_i32_0 = arith.constant 0 : i32
    %c0_i32_1 = arith.constant 0 : i32
    return %c0_i32, %c0_i32_0 : i32, i32
  }
  func.func @transform_10(%arg0: i32) -> (i32, i32, i32) {
    %c0_i32 = arith.constant 0 : i32
    %c0_i32_0 = arith.constant 0 : i32
    %c0_i32_1 = arith.constant 0 : i32
    return %arg0, %c0_i32, %c0_i32_0 : i32, i32, i32
  }
  func.func @transform_11(%arg0: i32) -> (i32, i32, i32) {
    %c0_i32 = arith.constant 0 : i32
    %c0_i32_0 = arith.constant 0 : i32
    %c0_i32_1 = arith.constant 0 : i32
    %c0_i32_2 = arith.constant 0 : i32
    return %c0_i32, %c0_i32_0, %c0_i32_1 : i32, i32, i32
  }
}

</mosaic_0001>

<llo_original>
// kernel: tpu_custom_call.1
$region0: #{tpu_custom_call.1}
  #allocation0 [shape = 'u32[]', space=smem, size = 0x4, offset = 0x4, fixed_abs, tag = 'smem constant byte address 0x4 - core index']
  #allocation1 [shape = 'u32[72,128]{1,0:T(1,128)}', space=vmem, size = 0x9000, scoped, tag = 'internal scratch']
  #allocation2 [shape = 'f32[2,32]{1,0:T(2,128)}', space=vmem, size = 0x400, scoped, tag = 'scratch operand']
  #allocation3 [shape = 'f32[2,32]{1,0:T(2,128)}', space=vmem, size = 0x400, scoped, tag = 'scratch operand']
  %s0 = inlined_call_operand.vmem [shape: f32[8,2,4], index: 0, kind: input, shape index: {}]
  %s1 = inlined_call_operand.vmem [shape: f32[2,2,32], index: 1, kind: input, shape index: {}]
  %s2 = inlined_call_operand.vmem [shape: f32[4,96], index: 2, kind: input, shape index: {}]
  %s3 = inlined_call_operand.hbm [shape: f32[32,96], index: 3, kind: input, shape index: {}]
  %s4 = inlined_call_operand.vmem [shape: f32[1,96], index: 4, kind: input, shape index: {}]
  %s5 = inlined_call_operand.vmem [shape: f32[1,96], index: 5, kind: input, shape index: {}]
  %s6 = inlined_call_operand.hbm [shape: f32[32,96], index: 6, kind: input, shape index: {}]
  %s7 = inlined_call_operand.hbm [shape: f32[32,96], index: 7, kind: input, shape index: {}]
  %s8 = inlined_call_operand.vmem [shape: f32[1,96], index: 8, kind: input, shape index: {}]
  %s9 = inlined_call_operand.vmem [shape: f32[1,96], index: 9, kind: input, shape index: {}]
  %s10 = inlined_call_operand.hbm [shape: f32[8,2,32], index: 10, kind: output, shape index: {0}]
  %s11 = inlined_call_operand.hbm [shape: f32[2,2,32], index: 11, kind: output, shape index: {1}]
  %12 = xla_tuple %s10, %s11
  %s13 = sld [smem:[#allocation0]]
  $region78: #{tpu_custom_call.1} parent=0
    _
  %s15 = ssub.s32 1, %s13
  %s16 = scalar_select 0, %s15, %s13
  $region1: #{tpu_custom_call.1} parent=0
    #allocation4 [shape = 'u8[16384]{0}', space=vmem, size = 0x4000, scoped, tag = 'input window, operand 3, single buffered']
    #allocation5 [shape = 's32[1]{0}', space=sflag, size = 0x4, scoped, tag = 'scoped memory for tpu_custom_call.1']
    #allocation6 [shape = 's32[1]{0}', space=sflag, size = 0x4, scoped, tag = 'scoped memory for tpu_custom_call.1']
    #allocation7 [shape = 'u8[16384]{0}', space=vmem, size = 0x4000, scoped, tag = 'input window, operand 6, single buffered']
    #allocation8 [shape = 's32[1]{0}', space=sflag, size = 0x4, scoped, tag = 'scoped memory for tpu_custom_call.1']
    #allocation9 [shape = 'u8[16384]{0}', space=vmem, size = 0x4000, scoped, tag = 'input window, operand 7, single buffered']
    #allocation10 [shape = 'u8[8192]{0}', space=vmem, size = 0x2000, scoped, tag = 'output window, operand 0, single buffered']
    #allocation11 [shape = 'u8[2048]{0}', space=vmem, size = 0x800, scoped, tag = 'output window, operand 1, single buffered']
    #allocation12 [shape = 's32[1]{0}', space=sflag, size = 0x4, scoped, tag = 'scoped memory for tpu_custom_call.1']
    %17 = vsyncpa [#allocation5], 0
    %18 = vsyncpa [#allocation8], 0
    %19 = vsyncpa [#allocation6], 0
    %20 = vsyncpa [#allocation12], 0
    // Predicated region
    $region2: #{tpu_custom_call.1} parent=1 // pred_check
      _
    $region3: #{tpu_custom_call.1} parent=1 // pred_check_branch
      %22 = sbr.rel (0) target = $region5
    $region4: #{tpu_custom_call.1} parent=1 // pred_region
      _
    $region5: #{tpu_custom_call.1} parent=1 // pred_fallthru
      _
    // Predicated region
    $region6: #{tpu_custom_call.1} parent=1 // pred_check
      _
    $region7: #{tpu_custom_call.1} parent=1 // pred_check_branch
      %24 = sbr.rel (0) target = $region9
    $region8: #{tpu_custom_call.1} parent=1 // pred_region
      _
    $region9: #{tpu_custom_call.1} parent=1 // pred_fallthru
      _
    // Predicated region
    $region10: #{tpu_custom_call.1} parent=1 // pred_check
      _
    $region11: #{tpu_custom_call.1} parent=1 // pred_check_branch
      %26 = sbr.rel (0) target = $region13
    $region12: #{tpu_custom_call.1} parent=1 // pred_region
      _
    $region13: #{tpu_custom_call.1} parent=1 // pred_fallthru
      _
    // Predicated region
    $region14: #{tpu_custom_call.1} parent=1 // pred_check
      _
    $region15: #{tpu_custom_call.1} parent=1 // pred_check_branch
      %28 = sbr.rel (0) target = $region17
    $region16: #{tpu_custom_call.1} parent=1 // pred_region
      %30 = vsyncadd [#allocation5], 0
      %s31 = sshll.u32 %s3, 4
      %s32 = int_to_ptr.hbm [resolvable:$true] %s31
      %s33 = sshll.u32 [#allocation4], 4
      %s34 = int_to_ptr.vmem [resolvable:$true] %s33
      %39 = dma.hbm_to_vmem [thread:$0]  %s32, 512, %s34, [#allocation5], 128, 128, 8
    $region17: #{tpu_custom_call.1} parent=1 // pred_fallthru
      _
    // Predicated region
    $region18: #{tpu_custom_call.1} parent=1 // pred_check
      _
    $region19: #{tpu_custom_call.1} parent=1 // pred_check_branch
      %41 = sbr.rel (0) target = $region21
    $region20: #{tpu_custom_call.1} parent=1 // pred_region
      _
    $region21: #{tpu_custom_call.1} parent=1 // pred_fallthru
      _
    // Predicated region
    $region22: #{tpu_custom_call.1} parent=1 // pred_check
      _
    $region23: #{tpu_custom_call.1} parent=1 // pred_check_branch
      %43 = sbr.rel (0) target = $region25
    $region24: #{tpu_custom_call.1} parent=1 // pred_region
      _
    $region25: #{tpu_custom_call.1} parent=1 // pred_fallthru
      _
    // Predicated region
    $region26: #{tpu_custom_call.1} parent=1 // pred_check
      _
    $region27: #{tpu_custom_call.1} parent=1 // pred_check_branch
      %45 = sbr.rel (0) target = $region29
    $region28: #{tpu_custom_call.1} parent=1 // pred_region
      %47 = vsyncadd [#allocation8], 0
      %s48 = sshll.u32 %s6, 4
      %s49 = int_to_ptr.hbm [resolvable:$true] %s48
      %s50 = sshll.u32 [#allocation7], 4
      %s51 = int_to_ptr.vmem [resolvable:$true] %s50
      %56 = dma.hbm_to_vmem [thread:$0]  %s49, 512, %s51, [#allocation8], 128, 128, 8
    $region29: #{tpu_custom_call.1} parent=1 // pred_fallthru
      _
    // Predicated region
    $region30: #{tpu_custom_call.1} parent=1 // pred_check
      _
    $region31: #{tpu_custom_call.1} parent=1 // pred_check_branch
      %58 = sbr.rel (0) target = $region33
    $region32: #{tpu_custom_call.1} parent=1 // pred_region
      %60 = vsyncadd [#allocation8], 0
      %s61 = sshll.u32 %s7, 4
      %s62 = int_to_ptr.hbm [resolvable:$true] %s61
      %s63 = sshll.u32 [#allocation9], 4
      %s64 = int_to_ptr.vmem [resolvable:$true] %s63
      %69 = dma.hbm_to_vmem [thread:$0]  %s62, 512, %s64, [#allocation8], 128, 128, 8
    $region33: #{tpu_custom_call.1} parent=1 // pred_fallthru
      _
    // Predicated region
    $region34: #{tpu_custom_call.1} parent=1 // pred_check
      _
    $region35: #{tpu_custom_call.1} parent=1 // pred_check_branch
      %71 = sbr.rel (0) target = $region37
    $region36: #{tpu_custom_call.1} parent=1 // pred_region
      _
    $region37: #{tpu_custom_call.1} parent=1 // pred_fallthru
      _
    // Predicated region
    $region38: #{tpu_custom_call.1} parent=1 // pred_check
      _
    $region39: #{tpu_custom_call.1} parent=1 // pred_check_branch
      %73 = sbr.rel (0) target = $region41
    $region40: #{tpu_custom_call.1} parent=1 // pred_region
      _
    $region41: #{tpu_custom_call.1} parent=1 // pred_fallthru
      _
    // Predicated region
    $region42: #{tpu_custom_call.1} parent=1 // pred_check
      _
    $region43: #{tpu_custom_call.1} parent=1 // pred_check_branch
      %75 = sbr.rel (0) target = $region45
    $region44: #{tpu_custom_call.1} parent=1 // pred_region
      %77 = dma.done [#allocation5], 512
    $region45: #{tpu_custom_call.1} parent=1 // pred_fallthru
      _
    // Predicated region
    $region46: #{tpu_custom_call.1} parent=1 // pred_check
      _
    $region47: #{tpu_custom_call.1} parent=1 // pred_check_branch
      %79 = sbr.rel (0) target = $region49
    $region48: #{tpu_custom_call.1} parent=1 // pred_region
      %81 = dma.done [#allocation8], 512
    $region49: #{tpu_custom_call.1} parent=1 // pred_fallthru
      _
    // Predicated region
    $region50: #{tpu_custom_call.1} parent=1 // pred_check
      _
    $region51: #{tpu_custom_call.1} parent=1 // pred_check_branch
      %83 = sbr.rel (0) target = $region53
    $region52: #{tpu_custom_call.1} parent=1 // pred_region
      %85 = dma.done [#allocation8], 512
    $region53: #{tpu_custom_call.1} parent=1 // pred_fallthru
      _
    %p86 = scmp.eq.s32.totalorder 0, 0
    // Predicated region
    $region54: #{tpu_custom_call.1} parent=1 // pred_check
      %p87 = pneg %p86
    $region55: #{tpu_custom_call.1} parent=1 // pred_check_branch
      %89 = sbr.rel (%p87) target = $region57
    $region56: #{tpu_custom_call.1} parent=1 // pred_region
      %v90 = vld [vmem:[%s1] sm:$0x3]
      %vm91 = vcmask 254976
      %92 = vst.msk [vmem:[#allocation2] sm:$0x3] %vm91, %v90
      %s93 = scalar_lea.vmem %s1, 2
      %v94 = vld [vmem:[%s93] sm:$0x3]
      %95 = vst.msk [vmem:[#allocation3] sm:$0x3] %vm91, %v94
    $region57: #{tpu_custom_call.1} parent=1 // pred_fallthru
      _
    %v96 = vld [vmem:[%s2] sm:$0xf]
    %v97 = vld [vmem:[#allocation4] sm:$0xff]
    %v98 = vld [vmem:[#allocation4 + $0x8] sm:$0xff]
    %v99 = vld [vmem:[#allocation4 + $0x10] sm:$0xff]
    %v100 = vld [vmem:[#allocation4 + $0x18] sm:$0xff]
    %v101 = vld [vmem:[%s4] sm:$0x1]
    %v102 = vld [vmem:[%s5] sm:$0x1]
    %v103 = vld [vmem:[#allocation7] sm:$0xff]
    %v104 = vld [vmem:[#allocation7 + $0x8] sm:$0xff]
    %v105 = vld [vmem:[#allocation7 + $0x10] sm:$0xff]
    %v106 = vld [vmem:[#allocation7 + $0x18] sm:$0xff]
    %v107 = vld [vmem:[#allocation9] sm:$0xff]
    %v108 = vld [vmem:[#allocation9 + $0x8] sm:$0xff]
    %v109 = vld [vmem:[#allocation9 + $0x10] sm:$0xff]
    %v110 = vld [vmem:[#allocation9 + $0x18] sm:$0xff]
    %v111 = vld [vmem:[%s8] sm:$0x1]
    %v112 = vld [vmem:[%s9] sm:$0x1]
    %v113 = vld [vmem:[#allocation2] sm:$0x3]
    %v114 = vld [vmem:[#allocation3] sm:$0x3]
    %v115 = vld [vmem:[%s0] sm:$0x3]
    %v117 = vperm.slane %v101, 0
    %vm119 = vcmask 31744
    %v121 = vsel %vm119, %v115, 0
    %vm123 = vcmask 1043456
    %v125 = vsel %vm123, %v96, 0
    %127 = vmatpush.msra.mxu0 0.0
    %128 = vmatpush.msra.mxu0 0.0
    %129 = vmatpush.msra.mxu0 0.0
    %130 = vmatpush.msra.mxu0 0.0
    %131 = vmatpush.msra.mxu0 0.0
    %132 = vmatpush.msra.mxu0 0.0
    %133 = vmatpush.msra.mxu0 0.0
    %134 = vmatpush.msra.mxu0 0.0
    %135 = vmatpush.msra.mxu0 0.0
    %136 = vmatpush.msra.mxu0 0.0
    %137 = vmatpush.msra.mxu0 0.0
    %138 = vmatpush.msra.mxu0 0.0
    %139 = vmatpush.msra.mxu0 0.0
    %140 = vmatpush.msra.mxu0 0.0
    %141 = vmatpush.msra.mxu0 0.0
    %142 = vmatpush.msra.mxu0 %v125
    %143 = vmatmul.f32.gmra.mxu0 %v121
    %v144 = vpop.f32.mrf.mxu0
    %v145 = vadd.f32 %v117, %v144
    %146 = vdwg.mxu0
    %v148 = vperm.slane %v102, 0
    %vm150 = vcmask 261120
    %v152 = vsel %vm150, %v113, 0
    %154 = vmatpush.msra.mxu0 0.0
    %155 = vmatpush.msra.mxu0 0.0
    %156 = vmatpush.msra.mxu0 0.0
    %157 = vmatpush.msra.mxu0 0.0
    %158 = vmatpush.msra.mxu0 0.0
    %159 = vmatpush.msra.mxu0 0.0
    %160 = vmatpush.msra.mxu0 0.0
    %161 = vmatpush.msra.mxu0 0.0
    %162 = vmatpush.msra.mxu0 0.0
    %163 = vmatpush.msra.mxu0 0.0
    %164 = vmatpush.msra.mxu0 0.0
    %165 = vmatpush.msra.mxu0 0.0
    %166 = vmatpush.msra.mxu0 %v100
    %167 = vmatpush.msra.mxu0 %v99
    %168 = vmatpush.msra.mxu0 %v98
    %169 = vmatpush.msra.mxu0 %v97
    %170 = vmatmul.f32.gmra.mxu0 %v152
    %v171 = vpop.f32.mrf.mxu0
    %v172 = vadd.f32 %v148, %v171
    %173 = vdwg.mxu0
    %v174 = vadd.f32 %v145, %v172
    %v175 = vxor.u32 %v174, 2147483648
    %v176 = vmul.f32 %v175, 1.442695
    %v177 = vpow.pop %v176
    %v178 = vadd.f32 %v177, 1.0
    %v179 = vrcp.pop %v178
    %v180 = vmul.f32 %v178, %v179
    %v181 = vsub.f32 1.0, %v180
    %v182 = vmul.f32 %v179, %v181
    %v183 = vadd.f32 %v179, %v182
    %vm184 = vweird.f32 %v178
    %vm185 = vweird.f32 %v179
    %vm186 = vmor %vm184, %vm185
    %v187 = vsel %vm186, %v179, %v183
    %v188 = vand.u32 2147483647, %v178
    %vm189 = vcmp.eq.f32.partialorder %v188, 8.507059e+37
    %v190 = vand.u32 %v178, 2147483648
    %v191 = vor.u32 1.1754944e-38, %v190
    %v192 = vsel %vm189, %v191, %v187
    %v193 = vmul.f32 1.0, %v192
    %195 = vrot.lane.b32.xlu0 %v172, 64
    %v196 = vpop.permute.xlu0 %195
    %v198 = vmul.f32 %v193, %v196
    %200 = vrot.lane.b32.xlu0 %v198, 64
    %v201 = vpop.permute.xlu0 %200
    %v203 = vadd.f32 %v145, %v201
    %v204 = vtanh.pop %v203
    %v205 = vsub.f32 1.0, %v193
    %207 = vrot.lane.b32.xlu0 %v204, 96
    %v208 = vpop.permute.xlu0 %207
    %v210 = vmul.f32 %v205, %v208
    %211 = vrot.lane.b32.xlu0 %v113, 32
    %v212 = vpop.permute.xlu0 %211
    %v214 = vmul.f32 %v193, %v212
    %v215 = vadd.f32 %v210, %v214
    %v217 = vperm.slane %v111, 0
    %220 = vrot.lane.b32.xlu0 %v215, 96
    %v221 = vpop.permute.xlu0 %220
    %v222 = vsel %vm150, %v221, 0
    %224 = vmatpush.msra.mxu0 0.0
    %225 = vmatpush.msra.mxu0 0.0
    %226 = vmatpush.msra.mxu0 0.0
    %227 = vmatpush.msra.mxu0 0.0
    %228 = vmatpush.msra.mxu0 0.0
    %229 = vmatpush.msra.mxu0 0.0
    %230 = vmatpush.msra.mxu0 0.0
    %231 = vmatpush.msra.mxu0 0.0
    %232 = vmatpush.msra.mxu0 0.0
    %233 = vmatpush.msra.mxu0 0.0
    %234 = vmatpush.msra.mxu0 0.0
    %235 = vmatpush.msra.mxu0 0.0
    %236 = vmatpush.msra.mxu0 %v106
    %237 = vmatpush.msra.mxu0 %v105
    %238 = vmatpush.msra.mxu0 %v104
    %239 = vmatpush.msra.mxu0 %v103
    %240 = vmatmul.f32.gmra.mxu0 %v222
    %v241 = vpop.f32.mrf.mxu0
    %v242 = vadd.f32 %v217, %v241
    %243 = vdwg.mxu0
    %v245 = vperm.slane %v112, 0
    %v248 = vsel %vm150, %v114, 0
    %250 = vmatpush.msra.mxu0 0.0
    %251 = vmatpush.msra.mxu0 0.0
    %252 = vmatpush.msra.mxu0 0.0
    %253 = vmatpush.msra.mxu0 0.0
    %254 = vmatpush.msra.mxu0 0.0
    %255 = vmatpush.msra.mxu0 0.0
    %256 = vmatpush.msra.mxu0 0.0
    %257 = vmatpush.msra.mxu0 0.0
    %258 = vmatpush.msra.mxu0 0.0
    %259 = vmatpush.msra.mxu0 0.0
    %260 = vmatpush.msra.mxu0 0.0
    %261 = vmatpush.msra.mxu0 0.0
    %262 = vmatpush.msra.mxu0 %v110
    %263 = vmatpush.msra.mxu0 %v109
    %264 = vmatpush.msra.mxu0 %v108
    %265 = vmatpush.msra.mxu0 %v107
    %266 = vmatmul.f32.gmra.mxu0 %v248
    %v267 = vpop.f32.mrf.mxu0
    %v268 = vadd.f32 %v245, %v267
    %269 = vdwg.mxu0
    %v270 = vadd.f32 %v242, %v268
    %v271 = vxor.u32 %v270, 2147483648
    %v272 = vmul.f32 %v271, 1.442695
    %v273 = vpow.pop %v272
    %v274 = vadd.f32 %v273, 1.0
    %v275 = vrcp.pop %v274
    %v276 = vmul.f32 %v274, %v275
    %v277 = vsub.f32 1.0, %v276
    %v278 = vmul.f32 %v275, %v277
    %v279 = vadd.f32 %v275, %v278
    %vm280 = vweird.f32 %v274
    %vm281 = vweird.f32 %v275
    %vm282 = vmor %vm280, %vm281
    %v283 = vsel %vm282, %v275, %v279
    %v284 = vand.u32 2147483647, %v274
    %vm285 = vcmp.eq.f32.partialorder %v284, 8.507059e+37
    %v286 = vand.u32 %v274, 2147483648
    %v287 = vor.u32 1.1754944e-38, %v286
    %v288 = vsel %vm285, %v287, %v283
    %v289 = vmul.f32 1.0, %v288
    %291 = vrot.lane.b32.xlu0 %v268, 64
    %v292 = vpop.permute.xlu0 %291
    %v294 = vmul.f32 %v289, %v292
    %296 = vrot.lane.b32.xlu0 %v294, 64
    %v297 = vpop.permute.xlu0 %296
    %v299 = vadd.f32 %v242, %v297
    %v300 = vtanh.pop %v299
    %v301 = vsub.f32 1.0, %v289
    %303 = vrot.lane.b32.xlu0 %v300, 96
    %v304 = vpop.permute.xlu0 %303
    %v306 = vmul.f32 %v301, %v304
    %307 = vrot.lane.b32.xlu0 %v114, 32
    %v308 = vpop.permute.xlu0 %307
    %v310 = vmul.f32 %v289, %v308
    %v311 = vadd.f32 %v306, %v310
    %313 = vrot.lane.b32.xlu0 %v311, 96
    %v314 = vpop.permute.xlu0 %313
    %vm316 = vcmask 254976
    %317 = vst.msk [vmem:[#allocation10] sm:$0x3] %vm316, %v314
    %s318 = scalar_lea.vmem %s0, 2
    %v319 = vld [vmem:[%s318] sm:$0x3]
    %v321 = vsel %vm119, %v319, 0
    %323 = vmatpush.msra.mxu0 0.0
    %324 = vmatpush.msra.mxu0 0.0
    %325 = vmatpush.msra.mxu0 0.0
    %326 = vmatpush.msra.mxu0 0.0
    %327 = vmatpush.msra.mxu0 0.0
    %328 = vmatpush.msra.mxu0 0.0
    %329 = vmatpush.msra.mxu0 0.0
    %330 = vmatpush.msra.mxu0 0.0
    %331 = vmatpush.msra.mxu0 0.0
    %332 = vmatpush.msra.mxu0 0.0
    %333 = vmatpush.msra.mxu0 0.0
    %334 = vmatpush.msra.mxu0 0.0
    %335 = vmatpush.msra.mxu0 0.0
    %336 = vmatpush.msra.mxu0 0.0
    %337 = vmatpush.msra.mxu0 0.0
    %338 = vmatpush.msra.mxu0 %v125
    %339 = vmatmul.f32.gmra.mxu0 %v321
    %v340 = vpop.f32.mrf.mxu0
    %v341 = vadd.f32 %v117, %v340
    %342 = vdwg.mxu0
    %343 = vmatpush.msra.mxu0 0.0
    %344 = vmatpush.msra.mxu0 0.0
    %345 = vmatpush.msra.mxu0 0.0
    %346 = vmatpush.msra.mxu0 0.0
    %347 = vmatpush.msra.mxu0 0.0
    %348 = vmatpush.msra.mxu0 0.0
    %349 = vmatpush.msra.mxu0 0.0
    %350 = vmatpush.msra.mxu0 0.0
    %351 = vmatpush.msra.mxu0 0.0
    %352 = vmatpush.msra.mxu0 0.0
    %353 = vmatpush.msra.mxu0 0.0
    %354 = vmatpush.msra.mxu0 0.0
    %355 = vmatpush.msra.mxu0 %v100
    %356 = vmatpush.msra.mxu0 %v99
    %357 = vmatpush.msra.mxu0 %v98
    %358 = vmatpush.msra.mxu0 %v97
    %359 = vmatmul.f32.gmra.mxu0 %v222
    %v360 = vpop.f32.mrf.mxu0
    %v361 = vadd.f32 %v148, %v360
    %362 = vdwg.mxu0
    %v363 = vadd.f32 %v341, %v361
    %v364 = vxor.u32 %v363, 2147483648
    %v365 = vmul.f32 %v364, 1.442695
    %v366 = vpow.pop %v365
    %v367 = vadd.f32 %v366, 1.0
    %v368 = vrcp.pop %v367
    %v369 = vmul.f32 %v367, %v368
    %v370 = vsub.f32 1.0, %v369
    %v371 = vmul.f32 %v368, %v370
    %v372 = vadd.f32 %v368, %v371
    %vm373 = vweird.f32 %v367
    %vm374 = vweird.f32 %v368
    %vm375 = vmor %vm373, %vm374
    %v376 = vsel %vm375, %v368, %v372
    %v377 = vand.u32 2147483647, %v367
    %vm378 = vcmp.eq.f32.partialorder %v377, 8.507059e+37
    %v379 = vand.u32 %v367, 2147483648
    %v380 = vor.u32 1.1754944e-38, %v379
    %v381 = vsel %vm378, %v380, %v376
    %v382 = vmul.f32 1.0, %v381
    %384 = vrot.lane.b32.xlu0 %v361, 64
    %v385 = vpop.permute.xlu0 %384
    %v387 = vmul.f32 %v382, %v385
    %389 = vrot.lane.b32.xlu0 %v387, 64
    %v390 = vpop.permute.xlu0 %389
    %v392 = vadd.f32 %v341, %v390
    %v393 = vtanh.pop %v392
    %v394 = vsub.f32 1.0, %v382
    %396 = vrot.lane.b32.xlu0 %v393, 96
    %v397 = vpop.permute.xlu0 %396
    %v399 = vmul.f32 %v394, %v397
    %v400 = vmul.f32 %v382, %v215
    %v401 = vadd.f32 %v399, %v400
    %403 = vrot.lane.b32.xlu0 %v401, 96
    %v404 = vpop.permute.xlu0 %403
    %v405 = vsel %vm150, %v404, 0
    %407 = vmatpush.msra.mxu0 0.0
    %408 = vmatpush.msra.mxu0 0.0
    %409 = vmatpush.msra.mxu0 0.0
    %410 = vmatpush.msra.mxu0 0.0
    %411 = vmatpush.msra.mxu0 0.0
    %412 = vmatpush.msra.mxu0 0.0
    %413 = vmatpush.msra.mxu0 0.0
    %414 = vmatpush.msra.mxu0 0.0
    %415 = vmatpush.msra.mxu0 0.0
    %416 = vmatpush.msra.mxu0 0.0
    %417 = vmatpush.msra.mxu0 0.0
    %418 = vmatpush.msra.mxu0 0.0
    %419 = vmatpush.msra.mxu0 %v106
    %420 = vmatpush.msra.mxu0 %v105
    %421 = vmatpush.msra.mxu0 %v104
    %422 = vmatpush.msra.mxu0 %v103
    %423 = vmatmul.f32.gmra.mxu0 %v405
    %v424 = vpop.f32.mrf.mxu0
    %v425 = vadd.f32 %v217, %v424
    %426 = vdwg.mxu0
    %v427 = vsel %vm150, %v314, 0
    %429 = vmatpush.msra.mxu0 0.0
    %430 = vmatpush.msra.mxu0 0.0
    %431 = vmatpush.msra.mxu0 0.0
    %432 = vmatpush.msra.mxu0 0.0
    %433 = vmatpush.msra.mxu0 0.0
    %434 = vmatpush.msra.mxu0 0.0
    %435 = vmatpush.msra.mxu0 0.0
    %436 = vmatpush.msra.mxu0 0.0
    %437 = vmatpush.msra.mxu0 0.0
    %438 = vmatpush.msra.mxu0 0.0
    %439 = vmatpush.msra.mxu0 0.0
    %440 = vmatpush.msra.mxu0 0.0
    %441 = vmatpush.msra.mxu0 %v110
    %442 = vmatpush.msra.mxu0 %v109
    %443 = vmatpush.msra.mxu0 %v108
    %444 = vmatpush.msra.mxu0 %v107
    %445 = vmatmul.f32.gmra.mxu0 %v427
    %v446 = vpop.f32.mrf.mxu0
    %v447 = vadd.f32 %v245, %v446
    %448 = vdwg.mxu0
    %v449 = vadd.f32 %v425, %v447
    %v450 = vxor.u32 %v449, 2147483648
    %v451 = vmul.f32 %v450, 1.442695
    %v452 = vpow.pop %v451
    %v453 = vadd.f32 %v452, 1.0
    %v454 = vrcp.pop %v453
    %v455 = vmul.f32 %v453, %v454
    %v456 = vsub.f32 1.0, %v455
    %v457 = vmul.f32 %v454, %v456
    %v458 = vadd.f32 %v454, %v457
    %vm459 = vweird.f32 %v453
    %vm460 = vweird.f32 %v454
    %vm461 = vmor %vm459, %vm460
    %v462 = vsel %vm461, %v454, %v458
    %v463 = vand.u32 2147483647, %v453
    %vm464 = vcmp.eq.f32.partialorder %v463, 8.507059e+37
    %v465 = vand.u32 %v453, 2147483648
    %v466 = vor.u32 1.1754944e-38, %v465
    %v467 = vsel %vm464, %v466, %v462
    %v468 = vmul.f32 1.0, %v467
    %470 = vrot.lane.b32.xlu0 %v447, 64
    %v471 = vpop.permute.xlu0 %470
    %v473 = vmul.f32 %v468, %v471
    %475 = vrot.lane.b32.xlu0 %v473, 64
    %v476 = vpop.permute.xlu0 %475
    %v478 = vadd.f32 %v425, %v476
    %v479 = vtanh.pop %v478
    %v480 = vsub.f32 1.0, %v468
    %482 = vrot.lane.b32.xlu0 %v479, 96
    %v483 = vpop.permute.xlu0 %482
    %v485 = vmul.f32 %v480, %v483
    %v486 = vmul.f32 %v468, %v311
    %v487 = vadd.f32 %v485, %v486
    %489 = vrot.lane.b32.xlu0 %v487, 96
    %v490 = vpop.permute.xlu0 %489
    %s492 = scalar_lea.vmem [#allocation10], 2
    %493 = vst.msk [vmem:[%s492] sm:$0x3] %vm316, %v490
    %s494 = scalar_lea.vmem %s0, 4
    %v495 = vld [vmem:[%s494] sm:$0x3]
    %v497 = vsel %vm119, %v495, 0
    %499 = vmatpush.msra.mxu0 0.0
    %500 = vmatpush.msra.mxu0 0.0
    %501 = vmatpush.msra.mxu0 0.0
    %502 = vmatpush.msra.mxu0 0.0
    %503 = vmatpush.msra.mxu0 0.0
    %504 = vmatpush.msra.mxu0 0.0
    %505 = vmatpush.msra.mxu0 0.0
    %506 = vmatpush.msra.mxu0 0.0
    %507 = vmatpush.msra.mxu0 0.0
    %508 = vmatpush.msra.mxu0 0.0
    %509 = vmatpush.msra.mxu0 0.0
    %510 = vmatpush.msra.mxu0 0.0
    %511 = vmatpush.msra.mxu0 0.0
    %512 = vmatpush.msra.mxu0 0.0
    %513 = vmatpush.msra.mxu0 0.0
    %514 = vmatpush.msra.mxu0 %v125
    %515 = vmatmul.f32.gmra.mxu0 %v497
    %v516 = vpop.f32.mrf.mxu0
    %v517 = vadd.f32 %v117, %v516
    %518 = vdwg.mxu0
    %519 = vmatpush.msra.mxu0 0.0
    %520 = vmatpush.msra.mxu0 0.0
    %521 = vmatpush.msra.mxu0 0.0
    %522 = vmatpush.msra.mxu0 0.0
    %523 = vmatpush.msra.mxu0 0.0
    %524 = vmatpush.msra.mxu0 0.0
    %525 = vmatpush.msra.mxu0 0.0
    %526 = vmatpush.msra.mxu0 0.0
    %527 = vmatpush.msra.mxu0 0.0
    %528 = vmatpush.msra.mxu0 0.0
    %529 = vmatpush.msra.mxu0 0.0
    %530 = vmatpush.msra.mxu0 0.0
    %531 = vmatpush.msra.mxu0 %v100
    %532 = vmatpush.msra.mxu0 %v99
    %533 = vmatpush.msra.mxu0 %v98
    %534 = vmatpush.msra.mxu0 %v97
    %535 = vmatmul.f32.gmra.mxu0 %v405
    %v536 = vpop.f32.mrf.mxu0
    %v537 = vadd.f32 %v148, %v536
    %538 = vdwg.mxu0
    %v539 = vadd.f32 %v517, %v537
    %v540 = vxor.u32 %v539, 2147483648
    %v541 = vmul.f32 %v540, 1.442695
    %v542 = vpow.pop %v541
    %v543 = vadd.f32 %v542, 1.0
    %v544 = vrcp.pop %v543
    %v545 = vmul.f32 %v543, %v544
    %v546 = vsub.f32 1.0, %v545
    %v547 = vmul.f32 %v544, %v546
    %v548 = vadd.f32 %v544, %v547
    %vm549 = vweird.f32 %v543
    %vm550 = vweird.f32 %v544
    %vm551 = vmor %vm549, %vm550
    %v552 = vsel %vm551, %v544, %v548
    %v553 = vand.u32 2147483647, %v543
    %vm554 = vcmp.eq.f32.partialorder %v553, 8.507059e+37
    %v555 = vand.u32 %v543, 2147483648
    %v556 = vor.u32 1.1754944e-38, %v555
    %v557 = vsel %vm554, %v556, %v552
    %v558 = vmul.f32 1.0, %v557
    %560 = vrot.lane.b32.xlu0 %v537, 64
    %v561 = vpop.permute.xlu0 %560
    %v563 = vmul.f32 %v558, %v561
    %565 = vrot.lane.b32.xlu0 %v563, 64
    %v566 = vpop.permute.xlu0 %565
    %v568 = vadd.f32 %v517, %v566
    %v569 = vtanh.pop %v568
    %v570 = vsub.f32 1.0, %v558
    %572 = vrot.lane.b32.xlu0 %v569, 96
    %v573 = vpop.permute.xlu0 %572
    %v575 = vmul.f32 %v570, %v573
    %v576 = vmul.f32 %v558, %v401
    %v577 = vadd.f32 %v575, %v576
    %579 = vrot.lane.b32.xlu0 %v577, 96
    %v580 = vpop.permute.xlu0 %579
    %v581 = vsel %vm150, %v580, 0
    %583 = vmatpush.msra.mxu0 0.0
    %584 = vmatpush.msra.mxu0 0.0
    %585 = vmatpush.msra.mxu0 0.0
    %586 = vmatpush.msra.mxu0 0.0
    %587 = vmatpush.msra.mxu0 0.0
    %588 = vmatpush.msra.mxu0 0.0
    %589 = vmatpush.msra.mxu0 0.0
    %590 = vmatpush.msra.mxu0 0.0
    %591 = vmatpush.msra.mxu0 0.0
    %592 = vmatpush.msra.mxu0 0.0
    %593 = vmatpush.msra.mxu0 0.0
    %594 = vmatpush.msra.mxu0 0.0
    %595 = vmatpush.msra.mxu0 %v106
    %596 = vmatpush.msra.mxu0 %v105
    %597 = vmatpush.msra.mxu0 %v104
    %598 = vmatpush.msra.mxu0 %v103
    %599 = vmatmul.f32.gmra.mxu0 %v581
    %v600 = vpop.f32.mrf.mxu0
    %v601 = vadd.f32 %v217, %v600
    %602 = vdwg.mxu0
    %v603 = vsel %vm150, %v490, 0
    %605 = vmatpush.msra.mxu0 0.0
    %606 = vmatpush.msra.mxu0 0.0
    %607 = vmatpush.msra.mxu0 0.0
    %608 = vmatpush.msra.mxu0 0.0
    %609 = vmatpush.msra.mxu0 0.0
    %610 = vmatpush.msra.mxu0 0.0
    %611 = vmatpush.msra.mxu0 0.0
    %612 = vmatpush.msra.mxu0 0.0
    %613 = vmatpush.msra.mxu0 0.0
    %614 = vmatpush.msra.mxu0 0.0
    %615 = vmatpush.msra.mxu0 0.0
    %616 = vmatpush.msra.mxu0 0.0
    %617 = vmatpush.msra.mxu0 %v110
    %618 = vmatpush.msra.mxu0 %v109
    %619 = vmatpush.msra.mxu0 %v108
    %620 = vmatpush.msra.mxu0 %v107
    %621 = vmatmul.f32.gmra.mxu0 %v603
    %v622 = vpop.f32.mrf.mxu0
    %v623 = vadd.f32 %v245, %v622
    %624 = vdwg.mxu0
    %v625 = vadd.f32 %v601, %v623
    %v626 = vxor.u32 %v625, 2147483648
    %v627 = vmul.f32 %v626, 1.442695
    %v628 = vpow.pop %v627
    %v629 = vadd.f32 %v628, 1.0
    %v630 = vrcp.pop %v629
    %v631 = vmul.f32 %v629, %v630
    %v632 = vsub.f32 1.0, %v631
    %v633 = vmul.f32 %v630, %v632
    %v634 = vadd.f32 %v630, %v633
    %vm635 = vweird.f32 %v629
    %vm636 = vweird.f32 %v630
    %vm637 = vmor %vm635, %vm636
    %v638 = vsel %vm637, %v630, %v634
    %v639 = vand.u32 2147483647, %v629
    %vm640 = vcmp.eq.f32.partialorder %v639, 8.507059e+37
    %v641 = vand.u32 %v629, 2147483648
    %v642 = vor.u32 1.1754944e-38, %v641
    %v643 = vsel %vm640, %v642, %v638
    %v644 = vmul.f32 1.0, %v643
    %646 = vrot.lane.b32.xlu0 %v623, 64
    %v647 = vpop.permute.xlu0 %646
    %v649 = vmul.f32 %v644, %v647
    %651 = vrot.lane.b32.xlu0 %v649, 64
    %v652 = vpop.permute.xlu0 %651
    %v654 = vadd.f32 %v601, %v652
    %v655 = vtanh.pop %v654
    %v656 = vsub.f32 1.0, %v644
    %658 = vrot.lane.b32.xlu0 %v655, 96
    %v659 = vpop.permute.xlu0 %658
    %v661 = vmul.f32 %v656, %v659
    %v662 = vmul.f32 %v644, %v487
    %v663 = vadd.f32 %v661, %v662
    %665 = vrot.lane.b32.xlu0 %v663, 96
    %v666 = vpop.permute.xlu0 %665
    %s668 = scalar_lea.vmem [#allocation10], 4
    %669 = vst.msk [vmem:[%s668] sm:$0x3] %vm316, %v666
    %s670 = scalar_lea.vmem %s0, 6
    %v671 = vld [vmem:[%s670] sm:$0x3]
    %v673 = vsel %vm119, %v671, 0
    %675 = vmatpush.msra.mxu0 0.0
    %676 = vmatpush.msra.mxu0 0.0
    %677 = vmatpush.msra.mxu0 0.0
    %678 = vmatpush.msra.mxu0 0.0
    %679 = vmatpush.msra.mxu0 0.0
    %680 = vmatpush.msra.mxu0 0.0
    %681 = vmatpush.msra.mxu0 0.0
    %682 = vmatpush.msra.mxu0 0.0
    %683 = vmatpush.msra.mxu0 0.0
    %684 = vmatpush.msra.mxu0 0.0
    %685 = vmatpush.msra.mxu0 0.0
    %686 = vmatpush.msra.mxu0 0.0
    %687 = vmatpush.msra.mxu0 0.0
    %688 = vmatpush.msra.mxu0 0.0
    %689 = vmatpush.msra.mxu0 0.0
    %690 = vmatpush.msra.mxu0 %v125
    %691 = vmatmul.f32.gmra.mxu0 %v673
    %v692 = vpop.f32.mrf.mxu0
    %v693 = vadd.f32 %v117, %v692
    %694 = vdwg.mxu0
    %695 = vmatpush.msra.mxu0 0.0
    %696 = vmatpush.msra.mxu0 0.0
    %697 = vmatpush.msra.mxu0 0.0
    %698 = vmatpush.msra.mxu0 0.0
    %699 = vmatpush.msra.mxu0 0.0
    %700 = vmatpush.msra.mxu0 0.0
    %701 = vmatpush.msra.mxu0 0.0
    %702 = vmatpush.msra.mxu0 0.0
    %703 = vmatpush.msra.mxu0 0.0
    %704 = vmatpush.msra.mxu0 0.0
    %705 = vmatpush.msra.mxu0 0.0
    %706 = vmatpush.msra.mxu0 0.0
    %707 = vmatpush.msra.mxu0 %v100
    %708 = vmatpush.msra.mxu0 %v99
    %709 = vmatpush.msra.mxu0 %v98
    %710 = vmatpush.msra.mxu0 %v97
    %711 = vmatmul.f32.gmra.mxu0 %v581
    %v712 = vpop.f32.mrf.mxu0
    %v713 = vadd.f32 %v148, %v712
    %714 = vdwg.mxu0
    %v715 = vadd.f32 %v693, %v713
    %v716 = vxor.u32 %v715, 2147483648
    %v717 = vmul.f32 %v716, 1.442695
    %v718 = vpow.pop %v717
    %v719 = vadd.f32 %v718, 1.0
    %v720 = vrcp.pop %v719
    %v721 = vmul.f32 %v719, %v720
    %v722 = vsub.f32 1.0, %v721
    %v723 = vmul.f32 %v720, %v722
    %v724 = vadd.f32 %v720, %v723
    %vm725 = vweird.f32 %v719
    %vm726 = vweird.f32 %v720
    %vm727 = vmor %vm725, %vm726
    %v728 = vsel %vm727, %v720, %v724
    %v729 = vand.u32 2147483647, %v719
    %vm730 = vcmp.eq.f32.partialorder %v729, 8.507059e+37
    %v731 = vand.u32 %v719, 2147483648
    %v732 = vor.u32 1.1754944e-38, %v731
    %v733 = vsel %vm730, %v732, %v728
    %v734 = vmul.f32 1.0, %v733
    %736 = vrot.lane.b32.xlu0 %v713, 64
    %v737 = vpop.permute.xlu0 %736
    %v739 = vmul.f32 %v734, %v737
    %741 = vrot.lane.b32.xlu0 %v739, 64
    %v742 = vpop.permute.xlu0 %741
    %v744 = vadd.f32 %v693, %v742
    %v745 = vtanh.pop %v744
    %v746 = vsub.f32 1.0, %v734
    %748 = vrot.lane.b32.xlu0 %v745, 96
    %v749 = vpop.permute.xlu0 %748
    %v751 = vmul.f32 %v746, %v749
    %v752 = vmul.f32 %v734, %v577
    %v753 = vadd.f32 %v751, %v752
    %755 = vrot.lane.b32.xlu0 %v753, 96
    %v756 = vpop.permute.xlu0 %755
    %v757 = vsel %vm150, %v756, 0
    %759 = vmatpush.msra.mxu0 0.0
    %760 = vmatpush.msra.mxu0 0.0
    %761 = vmatpush.msra.mxu0 0.0
    %762 = vmatpush.msra.mxu0 0.0
    %763 = vmatpush.msra.mxu0 0.0
    %764 = vmatpush.msra.mxu0 0.0
    %765 = vmatpush.msra.mxu0 0.0
    %766 = vmatpush.msra.mxu0 0.0
    %767 = vmatpush.msra.mxu0 0.0
    %768 = vmatpush.msra.mxu0 0.0
    %769 = vmatpush.msra.mxu0 0.0
    %770 = vmatpush.msra.mxu0 0.0
    %771 = vmatpush.msra.mxu0 %v106
    %772 = vmatpush.msra.mxu0 %v105
    %773 = vmatpush.msra.mxu0 %v104
    %774 = vmatpush.msra.mxu0 %v103
    %775 = vmatmul.f32.gmra.mxu0 %v757
    %v776 = vpop.f32.mrf.mxu0
    %v777 = vadd.f32 %v217, %v776
    %778 = vdwg.mxu0
    %v779 = vsel %vm150, %v666, 0
    %781 = vmatpush.msra.mxu0 0.0
    %782 = vmatpush.msra.mxu0 0.0
    %783 = vmatpush.msra.mxu0 0.0
    %784 = vmatpush.msra.mxu0 0.0
    %785 = vmatpush.msra.mxu0 0.0
    %786 = vmatpush.msra.mxu0 0.0
    %787 = vmatpush.msra.mxu0 0.0
    %788 = vmatpush.msra.mxu0 0.0
    %789 = vmatpush.msra.mxu0 0.0
    %790 = vmatpush.msra.mxu0 0.0
    %791 = vmatpush.msra.mxu0 0.0
    %792 = vmatpush.msra.mxu0 0.0
    %793 = vmatpush.msra.mxu0 %v110
    %794 = vmatpush.msra.mxu0 %v109
    %795 = vmatpush.msra.mxu0 %v108
    %796 = vmatpush.msra.mxu0 %v107
    %797 = vmatmul.f32.gmra.mxu0 %v779
    %v798 = vpop.f32.mrf.mxu0
    %v799 = vadd.f32 %v245, %v798
    %800 = vdwg.mxu0
    %v801 = vadd.f32 %v777, %v799
    %v802 = vxor.u32 %v801, 2147483648
    %v803 = vmul.f32 %v802, 1.442695
    %v804 = vpow.pop %v803
    %v805 = vadd.f32 %v804, 1.0
    %v806 = vrcp.pop %v805
    %v807 = vmul.f32 %v805, %v806
    %v808 = vsub.f32 1.0, %v807
    %v809 = vmul.f32 %v806, %v808
    %v810 = vadd.f32 %v806, %v809
    %vm811 = vweird.f32 %v805
    %vm812 = vweird.f32 %v806
    %vm813 = vmor %vm811, %vm812
    %v814 = vsel %vm813, %v806, %v810
    %v815 = vand.u32 2147483647, %v805
    %vm816 = vcmp.eq.f32.partialorder %v815, 8.507059e+37
    %v817 = vand.u32 %v805, 2147483648
    %v818 = vor.u32 1.1754944e-38, %v817
    %v819 = vsel %vm816, %v818, %v814
    %v820 = vmul.f32 1.0, %v819
    %822 = vrot.lane.b32.xlu0 %v799, 64
    %v823 = vpop.permute.xlu0 %822
    %v825 = vmul.f32 %v820, %v823
    %827 = vrot.lane.b32.xlu0 %v825, 64
    %v828 = vpop.permute.xlu0 %827
    %v830 = vadd.f32 %v777, %v828
    %v831 = vtanh.pop %v830
    %v832 = vsub.f32 1.0, %v820
    %834 = vrot.lane.b32.xlu0 %v831, 96
    %v835 = vpop.permute.xlu0 %834
    %v837 = vmul.f32 %v832, %v835
    %v838 = vmul.f32 %v820, %v663
    %v839 = vadd.f32 %v837, %v838
    %841 = vrot.lane.b32.xlu0 %v839, 96
    %v842 = vpop.permute.xlu0 %841
    %s844 = scalar_lea.vmem [#allocation10], 6
    %845 = vst.msk [vmem:[%s844] sm:$0x3] %vm316, %v842
    %s846 = scalar_lea.vmem %s0, 8
    %v847 = vld [vmem:[%s846] sm:$0x3]
    %v849 = vsel %vm119, %v847, 0
    %851 = vmatpush.msra.mxu0 0.0
    %852 = vmatpush.msra.mxu0 0.0
    %853 = vmatpush.msra.mxu0 0.0
    %854 = vmatpush.msra.mxu0 0.0
    %855 = vmatpush.msra.mxu0 0.0
    %856 = vmatpush.msra.mxu0 0.0
    %857 = vmatpush.msra.mxu0 0.0
    %858 = vmatpush.msra.mxu0 0.0
    %859 = vmatpush.msra.mxu0 0.0
    %860 = vmatpush.msra.mxu0 0.0
    %861 = vmatpush.msra.mxu0 0.0
    %862 = vmatpush.msra.mxu0 0.0
    %863 = vmatpush.msra.mxu0 0.0
    %864 = vmatpush.msra.mxu0 0.0
    %865 = vmatpush.msra.mxu0 0.0
    %866 = vmatpush.msra.mxu0 %v125
    %867 = vmatmul.f32.gmra.mxu0 %v849
    %v868 = vpop.f32.mrf.mxu0
    %v869 = vadd.f32 %v117, %v868
    %870 = vdwg.mxu0
    %871 = vmatpush.msra.mxu0 0.0
    %872 = vmatpush.msra.mxu0 0.0
    %873 = vmatpush.msra.mxu0 0.0
    %874 = vmatpush.msra.mxu0 0.0
    %875 = vmatpush.msra.mxu0 0.0
    %876 = vmatpush.msra.mxu0 0.0
    %877 = vmatpush.msra.mxu0 0.0
    %878 = vmatpush.msra.mxu0 0.0
    %879 = vmatpush.msra.mxu0 0.0
    %880 = vmatpush.msra.mxu0 0.0
    %881 = vmatpush.msra.mxu0 0.0
    %882 = vmatpush.msra.mxu0 0.0
    %883 = vmatpush.msra.mxu0 %v100
    %884 = vmatpush.msra.mxu0 %v99
    %885 = vmatpush.msra.mxu0 %v98
    %886 = vmatpush.msra.mxu0 %v97
    %887 = vmatmul.f32.gmra.mxu0 %v757
    %v888 = vpop.f32.mrf.mxu0
    %v889 = vadd.f32 %v148, %v888
    %890 = vdwg.mxu0
    %v891 = vadd.f32 %v869, %v889
    %v892 = vxor.u32 %v891, 2147483648
    %v893 = vmul.f32 %v892, 1.442695
    %v894 = vpow.pop %v893
    %v895 = vadd.f32 %v894, 1.0
    %v896 = vrcp.pop %v895
    %v897 = vmul.f32 %v895, %v896
    %v898 = vsub.f32 1.0, %v897
    %v899 = vmul.f32 %v896, %v898
    %v900 = vadd.f32 %v896, %v899
    %vm901 = vweird.f32 %v895
    %vm902 = vweird.f32 %v896
    %vm903 = vmor %vm901, %vm902
    %v904 = vsel %vm903, %v896, %v900
    %v905 = vand.u32 2147483647, %v895
    %vm906 = vcmp.eq.f32.partialorder %v905, 8.507059e+37
    %v907 = vand.u32 %v895, 2147483648
    %v908 = vor.u32 1.1754944e-38, %v907
    %v909 = vsel %vm906, %v908, %v904
    %v910 = vmul.f32 1.0, %v909
    %912 = vrot.lane.b32.xlu0 %v889, 64
    %v913 = vpop.permute.xlu0 %912
    %v915 = vmul.f32 %v910, %v913
    %917 = vrot.lane.b32.xlu0 %v915, 64
    %v918 = vpop.permute.xlu0 %917
    %v920 = vadd.f32 %v869, %v918
    %v921 = vtanh.pop %v920
    %v922 = vsub.f32 1.0, %v910
    %924 = vrot.lane.b32.xlu0 %v921, 96
    %v925 = vpop.permute.xlu0 %924
    %v927 = vmul.f32 %v922, %v925
    %v928 = vmul.f32 %v910, %v753
    %v929 = vadd.f32 %v927, %v928
    %931 = vrot.lane.b32.xlu0 %v929, 96
    %v932 = vpop.permute.xlu0 %931
    %v933 = vsel %vm150, %v932, 0
    %935 = vmatpush.msra.mxu0 0.0
    %936 = vmatpush.msra.mxu0 0.0
    %937 = vmatpush.msra.mxu0 0.0
    %938 = vmatpush.msra.mxu0 0.0
    %939 = vmatpush.msra.mxu0 0.0
    %940 = vmatpush.msra.mxu0 0.0
    %941 = vmatpush.msra.mxu0 0.0
    %942 = vmatpush.msra.mxu0 0.0
    %943 = vmatpush.msra.mxu0 0.0
    %944 = vmatpush.msra.mxu0 0.0
    %945 = vmatpush.msra.mxu0 0.0
    %946 = vmatpush.msra.mxu0 0.0
    %947 = vmatpush.msra.mxu0 %v106
    %948 = vmatpush.msra.mxu0 %v105
    %949 = vmatpush.msra.mxu0 %v104
    %950 = vmatpush.msra.mxu0 %v103
    %951 = vmatmul.f32.gmra.mxu0 %v933
    %v952 = vpop.f32.mrf.mxu0
    %v953 = vadd.f32 %v217, %v952
    %954 = vdwg.mxu0
    %v955 = vsel %vm150, %v842, 0
    %957 = vmatpush.msra.mxu0 0.0
    %958 = vmatpush.msra.mxu0 0.0
    %959 = vmatpush.msra.mxu0 0.0
    %960 = vmatpush.msra.mxu0 0.0
    %961 = vmatpush.msra.mxu0 0.0
    %962 = vmatpush.msra.mxu0 0.0
    %963 = vmatpush.msra.mxu0 0.0
    %964 = vmatpush.msra.mxu0 0.0
    %965 = vmatpush.msra.mxu0 0.0
    %966 = vmatpush.msra.mxu0 0.0
    %967 = vmatpush.msra.mxu0 0.0
    %968 = vmatpush.msra.mxu0 0.0
    %969 = vmatpush.msra.mxu0 %v110
    %970 = vmatpush.msra.mxu0 %v109
    %971 = vmatpush.msra.mxu0 %v108
    %972 = vmatpush.msra.mxu0 %v107
    %973 = vmatmul.f32.gmra.mxu0 %v955
    %v974 = vpop.f32.mrf.mxu0
    %v975 = vadd.f32 %v245, %v974
    %976 = vdwg.mxu0
    %v977 = vadd.f32 %v953, %v975
    %v978 = vxor.u32 %v977, 2147483648
    %v979 = vmul.f32 %v978, 1.442695
    %v980 = vpow.pop %v979
    %v981 = vadd.f32 %v980, 1.0
    %v982 = vrcp.pop %v981
    %v983 = vmul.f32 %v981, %v982
    %v984 = vsub.f32 1.0, %v983
    %v985 = vmul.f32 %v982, %v984
    %v986 = vadd.f32 %v982, %v985
    %vm987 = vweird.f32 %v981
    %vm988 = vweird.f32 %v982
    %vm989 = vmor %vm987, %vm988
    %v990 = vsel %vm989, %v982, %v986
    %v991 = vand.u32 2147483647, %v981
    %vm992 = vcmp.eq.f32.partialorder %v991, 8.507059e+37
    %v993 = vand.u32 %v981, 2147483648
    %v994 = vor.u32 1.1754944e-38, %v993
    %v995 = vsel %vm992, %v994, %v990
    %v996 = vmul.f32 1.0, %v995
    %998 = vrot.lane.b32.xlu0 %v975, 64
    %v999 = vpop.permute.xlu0 %998
    %v1001 = vmul.f32 %v996, %v999
    %1003 = vrot.lane.b32.xlu0 %v1001, 64
    %v1004 = vpop.permute.xlu0 %1003
    %v1006 = vadd.f32 %v953, %v1004
    %v1007 = vtanh.pop %v1006
    %v1008 = vsub.f32 1.0, %v996
    %1010 = vrot.lane.b32.xlu0 %v1007, 96
    %v1011 = vpop.permute.xlu0 %1010
    %v1013 = vmul.f32 %v1008, %v1011
    %v1014 = vmul.f32 %v996, %v839
    %v1015 = vadd.f32 %v1013, %v1014
    %1017 = vrot.lane.b32.xlu0 %v1015, 96
    %v1018 = vpop.permute.xlu0 %1017
    %s1020 = scalar_lea.vmem [#allocation10], 8
    %1021 = vst.msk [vmem:[%s1020] sm:$0x3] %vm316, %v1018
    %s1022 = scalar_lea.vmem %s0, 10
    %v1023 = vld [vmem:[%s1022] sm:$0x3]
    %v1025 = vsel %vm119, %v1023, 0
    %1027 = vmatpush.msra.mxu0 0.0
    %1028 = vmatpush.msra.mxu0 0.0
    %1029 = vmatpush.msra.mxu0 0.0
    %1030 = vmatpush.msra.mxu0 0.0
    %1031 = vmatpush.msra.mxu0 0.0
    %1032 = vmatpush.msra.mxu0 0.0
    %1033 = vmatpush.msra.mxu0 0.0
    %1034 = vmatpush.msra.mxu0 0.0
    %1035 = vmatpush.msra.mxu0 0.0
    %1036 = vmatpush.msra.mxu0 0.0
    %1037 = vmatpush.msra.mxu0 0.0
    %1038 = vmatpush.msra.mxu0 0.0
    %1039 = vmatpush.msra.mxu0 0.0
    %1040 = vmatpush.msra.mxu0 0.0
    %1041 = vmatpush.msra.mxu0 0.0
    %1042 = vmatpush.msra.mxu0 %v125
    %1043 = vmatmul.f32.gmra.mxu0 %v1025
    %v1044 = vpop.f32.mrf.mxu0
    %v1045 = vadd.f32 %v117, %v1044
    %1046 = vdwg.mxu0
    %1047 = vmatpush.msra.mxu0 0.0
    %1048 = vmatpush.msra.mxu0 0.0
    %1049 = vmatpush.msra.mxu0 0.0
    %1050 = vmatpush.msra.mxu0 0.0
    %1051 = vmatpush.msra.mxu0 0.0
    %1052 = vmatpush.msra.mxu0 0.0
    %1053 = vmatpush.msra.mxu0 0.0
    %1054 = vmatpush.msra.mxu0 0.0
    %1055 = vmatpush.msra.mxu0 0.0
    %1056 = vmatpush.msra.mxu0 0.0
    %1057 = vmatpush.msra.mxu0 0.0
    %1058 = vmatpush.msra.mxu0 0.0
    %1059 = vmatpush.msra.mxu0 %v100
    %1060 = vmatpush.msra.mxu0 %v99
    %1061 = vmatpush.msra.mxu0 %v98
    %1062 = vmatpush.msra.mxu0 %v97
    %1063 = vmatmul.f32.gmra.mxu0 %v933
    %v1064 = vpop.f32.mrf.mxu0
    %v1065 = vadd.f32 %v148, %v1064
    %1066 = vdwg.mxu0
    %v1067 = vadd.f32 %v1045, %v1065
    %v1068 = vxor.u32 %v1067, 2147483648
    %v1069 = vmul.f32 %v1068, 1.442695
    %v1070 = vpow.pop %v1069
    %v1071 = vadd.f32 %v1070, 1.0
    %v1072 = vrcp.pop %v1071
    %v1073 = vmul.f32 %v1071, %v1072
    %v1074 = vsub.f32 1.0, %v1073
    %v1075 = vmul.f32 %v1072, %v1074
    %v1076 = vadd.f32 %v1072, %v1075
    %vm1077 = vweird.f32 %v1071
    %vm1078 = vweird.f32 %v1072
    %vm1079 = vmor %vm1077, %vm1078
    %v1080 = vsel %vm1079, %v1072, %v1076
    %v1081 = vand.u32 2147483647, %v1071
    %vm1082 = vcmp.eq.f32.partialorder %v1081, 8.507059e+37
    %v1083 = vand.u32 %v1071, 2147483648
    %v1084 = vor.u32 1.1754944e-38, %v1083
    %v1085 = vsel %vm1082, %v1084, %v1080
    %v1086 = vmul.f32 1.0, %v1085
    %1088 = vrot.lane.b32.xlu0 %v1065, 64
    %v1089 = vpop.permute.xlu0 %1088
    %v1091 = vmul.f32 %v1086, %v1089
    %1093 = vrot.lane.b32.xlu0 %v1091, 64
    %v1094 = vpop.permute.xlu0 %1093
    %v1096 = vadd.f32 %v1045, %v1094
    %v1097 = vtanh.pop %v1096
    %v1098 = vsub.f32 1.0, %v1086
    %1100 = vrot.lane.b32.xlu0 %v1097, 96
    %v1101 = vpop.permute.xlu0 %1100
    %v1103 = vmul.f32 %v1098, %v1101
    %v1104 = vmul.f32 %v1086, %v929
    %v1105 = vadd.f32 %v1103, %v1104
    %1107 = vrot.lane.b32.xlu0 %v1105, 96
    %v1108 = vpop.permute.xlu0 %1107
    %v1109 = vsel %vm150, %v1108, 0
    %1111 = vmatpush.msra.mxu0 0.0
    %1112 = vmatpush.msra.mxu0 0.0
    %1113 = vmatpush.msra.mxu0 0.0
    %1114 = vmatpush.msra.mxu0 0.0
    %1115 = vmatpush.msra.mxu0 0.0
    %1116 = vmatpush.msra.mxu0 0.0
    %1117 = vmatpush.msra.mxu0 0.0
    %1118 = vmatpush.msra.mxu0 0.0
    %1119 = vmatpush.msra.mxu0 0.0
    %1120 = vmatpush.msra.mxu0 0.0
    %1121 = vmatpush.msra.mxu0 0.0
    %1122 = vmatpush.msra.mxu0 0.0
    %1123 = vmatpush.msra.mxu0 %v106
    %1124 = vmatpush.msra.mxu0 %v105
    %1125 = vmatpush.msra.mxu0 %v104
    %1126 = vmatpush.msra.mxu0 %v103
    %1127 = vmatmul.f32.gmra.mxu0 %v1109
    %v1128 = vpop.f32.mrf.mxu0
    %v1129 = vadd.f32 %v217, %v1128
    %1130 = vdwg.mxu0
    %v1131 = vsel %vm150, %v1018, 0
    %1133 = vmatpush.msra.mxu0 0.0
    %1134 = vmatpush.msra.mxu0 0.0
    %1135 = vmatpush.msra.mxu0 0.0
    %1136 = vmatpush.msra.mxu0 0.0
    %1137 = vmatpush.msra.mxu0 0.0
    %1138 = vmatpush.msra.mxu0 0.0
    %1139 = vmatpush.msra.mxu0 0.0
    %1140 = vmatpush.msra.mxu0 0.0
    %1141 = vmatpush.msra.mxu0 0.0
    %1142 = vmatpush.msra.mxu0 0.0
    %1143 = vmatpush.msra.mxu0 0.0
    %1144 = vmatpush.msra.mxu0 0.0
    %1145 = vmatpush.msra.mxu0 %v110
    %1146 = vmatpush.msra.mxu0 %v109
    %1147 = vmatpush.msra.mxu0 %v108
    %1148 = vmatpush.msra.mxu0 %v107
    %1149 = vmatmul.f32.gmra.mxu0 %v1131
    %v1150 = vpop.f32.mrf.mxu0
    %v1151 = vadd.f32 %v245, %v1150
    %1152 = vdwg.mxu0
    %v1153 = vadd.f32 %v1129, %v1151
    %v1154 = vxor.u32 %v1153, 2147483648
    %v1155 = vmul.f32 %v1154, 1.442695
    %v1156 = vpow.pop %v1155
    %v1157 = vadd.f32 %v1156, 1.0
    %v1158 = vrcp.pop %v1157
    %v1159 = vmul.f32 %v1157, %v1158
    %v1160 = vsub.f32 1.0, %v1159
    %v1161 = vmul.f32 %v1158, %v1160
    %v1162 = vadd.f32 %v1158, %v1161
    %vm1163 = vweird.f32 %v1157
    %vm1164 = vweird.f32 %v1158
    %vm1165 = vmor %vm1163, %vm1164
    %v1166 = vsel %vm1165, %v1158, %v1162
    %v1167 = vand.u32 2147483647, %v1157
    %vm1168 = vcmp.eq.f32.partialorder %v1167, 8.507059e+37
    %v1169 = vand.u32 %v1157, 2147483648
    %v1170 = vor.u32 1.1754944e-38, %v1169
    %v1171 = vsel %vm1168, %v1170, %v1166
    %v1172 = vmul.f32 1.0, %v1171
    %1174 = vrot.lane.b32.xlu0 %v1151, 64
    %v1175 = vpop.permute.xlu0 %1174
    %v1177 = vmul.f32 %v1172, %v1175
    %1179 = vrot.lane.b32.xlu0 %v1177, 64
    %v1180 = vpop.permute.xlu0 %1179
    %v1182 = vadd.f32 %v1129, %v1180
    %v1183 = vtanh.pop %v1182
    %v1184 = vsub.f32 1.0, %v1172
    %1186 = vrot.lane.b32.xlu0 %v1183, 96
    %v1187 = vpop.permute.xlu0 %1186
    %v1189 = vmul.f32 %v1184, %v1187
    %v1190 = vmul.f32 %v1172, %v1015
    %v1191 = vadd.f32 %v1189, %v1190
    %1193 = vrot.lane.b32.xlu0 %v1191, 96
    %v1194 = vpop.permute.xlu0 %1193
    %s1196 = scalar_lea.vmem [#allocation10], 10
    %1197 = vst.msk [vmem:[%s1196] sm:$0x3] %vm316, %v1194
    %s1198 = scalar_lea.vmem %s0, 12
    %v1199 = vld [vmem:[%s1198] sm:$0x3]
    %v1201 = vsel %vm119, %v1199, 0
    %1203 = vmatpush.msra.mxu0 0.0
    %1204 = vmatpush.msra.mxu0 0.0
    %1205 = vmatpush.msra.mxu0 0.0
    %1206 = vmatpush.msra.mxu0 0.0
    %1207 = vmatpush.msra.mxu0 0.0
    %1208 = vmatpush.msra.mxu0 0.0
    %1209 = vmatpush.msra.mxu0 0.0
    %1210 = vmatpush.msra.mxu0 0.0
    %1211 = vmatpush.msra.mxu0 0.0
    %1212 = vmatpush.msra.mxu0 0.0
    %1213 = vmatpush.msra.mxu0 0.0
    %1214 = vmatpush.msra.mxu0 0.0
    %1215 = vmatpush.msra.mxu0 0.0
    %1216 = vmatpush.msra.mxu0 0.0
    %1217 = vmatpush.msra.mxu0 0.0
    %1218 = vmatpush.msra.mxu0 %v125
    %1219 = vmatmul.f32.gmra.mxu0 %v1201
    %v1220 = vpop.f32.mrf.mxu0
    %v1221 = vadd.f32 %v117, %v1220
    %1222 = vdwg.mxu0
    %1223 = vmatpush.msra.mxu0 0.0
    %1224 = vmatpush.msra.mxu0 0.0
    %1225 = vmatpush.msra.mxu0 0.0
    %1226 = vmatpush.msra.mxu0 0.0
    %1227 = vmatpush.msra.mxu0 0.0
    %1228 = vmatpush.msra.mxu0 0.0
    %1229 = vmatpush.msra.mxu0 0.0
    %1230 = vmatpush.msra.mxu0 0.0
    %1231 = vmatpush.msra.mxu0 0.0
    %1232 = vmatpush.msra.mxu0 0.0
    %1233 = vmatpush.msra.mxu0 0.0
    %1234 = vmatpush.msra.mxu0 0.0
    %1235 = vmatpush.msra.mxu0 %v100
    %1236 = vmatpush.msra.mxu0 %v99
    %1237 = vmatpush.msra.mxu0 %v98
    %1238 = vmatpush.msra.mxu0 %v97
    %1239 = vmatmul.f32.gmra.mxu0 %v1109
    %v1240 = vpop.f32.mrf.mxu0
    %v1241 = vadd.f32 %v148, %v1240
    %1242 = vdwg.mxu0
    %v1243 = vadd.f32 %v1221, %v1241
    %v1244 = vxor.u32 %v1243, 2147483648
    %v1245 = vmul.f32 %v1244, 1.442695
    %v1246 = vpow.pop %v1245
    %v1247 = vadd.f32 %v1246, 1.0
    %v1248 = vrcp.pop %v1247
    %v1249 = vmul.f32 %v1247, %v1248
    %v1250 = vsub.f32 1.0, %v1249
    %v1251 = vmul.f32 %v1248, %v1250
    %v1252 = vadd.f32 %v1248, %v1251
    %vm1253 = vweird.f32 %v1247
    %vm1254 = vweird.f32 %v1248
    %vm1255 = vmor %vm1253, %vm1254
    %v1256 = vsel %vm1255, %v1248, %v1252
    %v1257 = vand.u32 2147483647, %v1247
    %vm1258 = vcmp.eq.f32.partialorder %v1257, 8.507059e+37
    %v1259 = vand.u32 %v1247, 2147483648
    %v1260 = vor.u32 1.1754944e-38, %v1259
    %v1261 = vsel %vm1258, %v1260, %v1256
    %v1262 = vmul.f32 1.0, %v1261
    %1264 = vrot.lane.b32.xlu0 %v1241, 64
    %v1265 = vpop.permute.xlu0 %1264
    %v1267 = vmul.f32 %v1262, %v1265
    %1269 = vrot.lane.b32.xlu0 %v1267, 64
    %v1270 = vpop.permute.xlu0 %1269
    %v1272 = vadd.f32 %v1221, %v1270
    %v1273 = vtanh.pop %v1272
    %v1274 = vsub.f32 1.0, %v1262
    %1276 = vrot.lane.b32.xlu0 %v1273, 96
    %v1277 = vpop.permute.xlu0 %1276
    %v1279 = vmul.f32 %v1274, %v1277
    %v1280 = vmul.f32 %v1262, %v1105
    %v1281 = vadd.f32 %v1279, %v1280
    %1283 = vrot.lane.b32.xlu0 %v1281, 96
    %v1284 = vpop.permute.xlu0 %1283
    %v1285 = vsel %vm150, %v1284, 0
    %1287 = vmatpush.msra.mxu0 0.0
    %1288 = vmatpush.msra.mxu0 0.0
    %1289 = vmatpush.msra.mxu0 0.0
    %1290 = vmatpush.msra.mxu0 0.0
    %1291 = vmatpush.msra.mxu0 0.0
    %1292 = vmatpush.msra.mxu0 0.0
    %1293 = vmatpush.msra.mxu0 0.0
    %1294 = vmatpush.msra.mxu0 0.0
    %1295 = vmatpush.msra.mxu0 0.0
    %1296 = vmatpush.msra.mxu0 0.0
    %1297 = vmatpush.msra.mxu0 0.0
    %1298 = vmatpush.msra.mxu0 0.0
    %1299 = vmatpush.msra.mxu0 %v106
    %1300 = vmatpush.msra.mxu0 %v105
    %1301 = vmatpush.msra.mxu0 %v104
    %1302 = vmatpush.msra.mxu0 %v103
    %1303 = vmatmul.f32.gmra.mxu0 %v1285
    %v1304 = vpop.f32.mrf.mxu0
    %v1305 = vadd.f32 %v217, %v1304
    %1306 = vdwg.mxu0
    %v1307 = vsel %vm150, %v1194, 0
    %1309 = vmatpush.msra.mxu0 0.0
    %1310 = vmatpush.msra.mxu0 0.0
    %1311 = vmatpush.msra.mxu0 0.0
    %1312 = vmatpush.msra.mxu0 0.0
    %1313 = vmatpush.msra.mxu0 0.0
    %1314 = vmatpush.msra.mxu0 0.0
    %1315 = vmatpush.msra.mxu0 0.0
    %1316 = vmatpush.msra.mxu0 0.0
    %1317 = vmatpush.msra.mxu0 0.0
    %1318 = vmatpush.msra.mxu0 0.0
    %1319 = vmatpush.msra.mxu0 0.0
    %1320 = vmatpush.msra.mxu0 0.0
    %1321 = vmatpush.msra.mxu0 %v110
    %1322 = vmatpush.msra.mxu0 %v109
    %1323 = vmatpush.msra.mxu0 %v108
    %1324 = vmatpush.msra.mxu0 %v107
    %1325 = vmatmul.f32.gmra.mxu0 %v1307
    %v1326 = vpop.f32.mrf.mxu0
    %v1327 = vadd.f32 %v245, %v1326
    %1328 = vdwg.mxu0
    %v1329 = vadd.f32 %v1305, %v1327
    %v1330 = vxor.u32 %v1329, 2147483648
    %v1331 = vmul.f32 %v1330, 1.442695
    %v1332 = vpow.pop %v1331
    %v1333 = vadd.f32 %v1332, 1.0
    %v1334 = vrcp.pop %v1333
    %v1335 = vmul.f32 %v1333, %v1334
    %v1336 = vsub.f32 1.0, %v1335
    %v1337 = vmul.f32 %v1334, %v1336
    %v1338 = vadd.f32 %v1334, %v1337
    %vm1339 = vweird.f32 %v1333
    %vm1340 = vweird.f32 %v1334
    %vm1341 = vmor %vm1339, %vm1340
    %v1342 = vsel %vm1341, %v1334, %v1338
    %v1343 = vand.u32 2147483647, %v1333
    %vm1344 = vcmp.eq.f32.partialorder %v1343, 8.507059e+37
    %v1345 = vand.u32 %v1333, 2147483648
    %v1346 = vor.u32 1.1754944e-38, %v1345
    %v1347 = vsel %vm1344, %v1346, %v1342
    %v1348 = vmul.f32 1.0, %v1347
    %1350 = vrot.lane.b32.xlu0 %v1327, 64
    %v1351 = vpop.permute.xlu0 %1350
    %v1353 = vmul.f32 %v1348, %v1351
    %1355 = vrot.lane.b32.xlu0 %v1353, 64
    %v1356 = vpop.permute.xlu0 %1355
    %v1358 = vadd.f32 %v1305, %v1356
    %v1359 = vtanh.pop %v1358
    %v1360 = vsub.f32 1.0, %v1348
    %1362 = vrot.lane.b32.xlu0 %v1359, 96
    %v1363 = vpop.permute.xlu0 %1362
    %v1365 = vmul.f32 %v1360, %v1363
    %v1366 = vmul.f32 %v1348, %v1191
    %v1367 = vadd.f32 %v1365, %v1366
    %1369 = vrot.lane.b32.xlu0 %v1367, 96
    %v1370 = vpop.permute.xlu0 %1369
    %s1372 = scalar_lea.vmem [#allocation10], 12
    %1373 = vst.msk [vmem:[%s1372] sm:$0x3] %vm316, %v1370
    %s1374 = scalar_lea.vmem %s0, 14
    %v1375 = vld [vmem:[%s1374] sm:$0x3]
    %v1377 = vsel %vm119, %v1375, 0
    %1379 = vmatpush.msra.mxu0 0.0
    %1380 = vmatpush.msra.mxu0 0.0
    %1381 = vmatpush.msra.mxu0 0.0
    %1382 = vmatpush.msra.mxu0 0.0
    %1383 = vmatpush.msra.mxu0 0.0
    %1384 = vmatpush.msra.mxu0 0.0
    %1385 = vmatpush.msra.mxu0 0.0
    %1386 = vmatpush.msra.mxu0 0.0
    %1387 = vmatpush.msra.mxu0 0.0
    %1388 = vmatpush.msra.mxu0 0.0
    %1389 = vmatpush.msra.mxu0 0.0
    %1390 = vmatpush.msra.mxu0 0.0
    %1391 = vmatpush.msra.mxu0 0.0
    %1392 = vmatpush.msra.mxu0 0.0
    %1393 = vmatpush.msra.mxu0 0.0
    %1394 = vmatpush.msra.mxu0 %v125
    %1395 = vmatmul.f32.gmra.mxu0 %v1377
    %v1396 = vpop.f32.mrf.mxu0
    %v1397 = vadd.f32 %v117, %v1396
    %1398 = vdwg.mxu0
    %1399 = vmatpush.msra.mxu0 0.0
    %1400 = vmatpush.msra.mxu0 0.0
    %1401 = vmatpush.msra.mxu0 0.0
    %1402 = vmatpush.msra.mxu0 0.0
    %1403 = vmatpush.msra.mxu0 0.0
    %1404 = vmatpush.msra.mxu0 0.0
    %1405 = vmatpush.msra.mxu0 0.0
    %1406 = vmatpush.msra.mxu0 0.0
    %1407 = vmatpush.msra.mxu0 0.0
    %1408 = vmatpush.msra.mxu0 0.0
    %1409 = vmatpush.msra.mxu0 0.0
    %1410 = vmatpush.msra.mxu0 0.0
    %1411 = vmatpush.msra.mxu0 %v100
    %1412 = vmatpush.msra.mxu0 %v99
    %1413 = vmatpush.msra.mxu0 %v98
    %1414 = vmatpush.msra.mxu0 %v97
    %1415 = vmatmul.f32.gmra.mxu0 %v1285
    %v1416 = vpop.f32.mrf.mxu0
    %v1417 = vadd.f32 %v148, %v1416
    %1418 = vdwg.mxu0
    %v1419 = vadd.f32 %v1397, %v1417
    %v1420 = vxor.u32 %v1419, 2147483648
    %v1421 = vmul.f32 %v1420, 1.442695
    %v1422 = vpow.pop %v1421
    %v1423 = vadd.f32 %v1422, 1.0
    %v1424 = vrcp.pop %v1423
    %v1425 = vmul.f32 %v1423, %v1424
    %v1426 = vsub.f32 1.0, %v1425
    %v1427 = vmul.f32 %v1424, %v1426
    %v1428 = vadd.f32 %v1424, %v1427
    %vm1429 = vweird.f32 %v1423
    %vm1430 = vweird.f32 %v1424
    %vm1431 = vmor %vm1429, %vm1430
    %v1432 = vsel %vm1431, %v1424, %v1428
    %v1433 = vand.u32 2147483647, %v1423
    %vm1434 = vcmp.eq.f32.partialorder %v1433, 8.507059e+37
    %v1435 = vand.u32 %v1423, 2147483648
    %v1436 = vor.u32 1.1754944e-38, %v1435
    %v1437 = vsel %vm1434, %v1436, %v1432
    %v1438 = vmul.f32 1.0, %v1437
    %1440 = vrot.lane.b32.xlu0 %v1417, 64
    %v1441 = vpop.permute.xlu0 %1440
    %v1443 = vmul.f32 %v1438, %v1441
    %1445 = vrot.lane.b32.xlu0 %v1443, 64
    %v1446 = vpop.permute.xlu0 %1445
    %v1448 = vadd.f32 %v1397, %v1446
    %v1449 = vtanh.pop %v1448
    %v1450 = vsub.f32 1.0, %v1438
    %1452 = vrot.lane.b32.xlu0 %v1449, 96
    %v1453 = vpop.permute.xlu0 %1452
    %v1455 = vmul.f32 %v1450, %v1453
    %v1456 = vmul.f32 %v1438, %v1281
    %v1457 = vadd.f32 %v1455, %v1456
    %1459 = vrot.lane.b32.xlu0 %v1457, 96
    %v1460 = vpop.permute.xlu0 %1459
    %v1461 = vsel %vm150, %v1460, 0
    %1463 = vmatpush.msra.mxu0 0.0
    %1464 = vmatpush.msra.mxu0 0.0
    %1465 = vmatpush.msra.mxu0 0.0
    %1466 = vmatpush.msra.mxu0 0.0
    %1467 = vmatpush.msra.mxu0 0.0
    %1468 = vmatpush.msra.mxu0 0.0
    %1469 = vmatpush.msra.mxu0 0.0
    %1470 = vmatpush.msra.mxu0 0.0
    %1471 = vmatpush.msra.mxu0 0.0
    %1472 = vmatpush.msra.mxu0 0.0
    %1473 = vmatpush.msra.mxu0 0.0
    %1474 = vmatpush.msra.mxu0 0.0
    %1475 = vmatpush.msra.mxu0 %v106
    %1476 = vmatpush.msra.mxu0 %v105
    %1477 = vmatpush.msra.mxu0 %v104
    %1478 = vmatpush.msra.mxu0 %v103
    %1479 = vmatmul.f32.gmra.mxu0 %v1461
    %v1480 = vpop.f32.mrf.mxu0
    %v1481 = vadd.f32 %v217, %v1480
    %1482 = vdwg.mxu0
    %v1483 = vsel %vm150, %v1370, 0
    %1485 = vmatpush.msra.mxu0 0.0
    %1486 = vmatpush.msra.mxu0 0.0
    %1487 = vmatpush.msra.mxu0 0.0
    %1488 = vmatpush.msra.mxu0 0.0
    %1489 = vmatpush.msra.mxu0 0.0
    %1490 = vmatpush.msra.mxu0 0.0
    %1491 = vmatpush.msra.mxu0 0.0
    %1492 = vmatpush.msra.mxu0 0.0
    %1493 = vmatpush.msra.mxu0 0.0
    %1494 = vmatpush.msra.mxu0 0.0
    %1495 = vmatpush.msra.mxu0 0.0
    %1496 = vmatpush.msra.mxu0 0.0
    %1497 = vmatpush.msra.mxu0 %v110
    %1498 = vmatpush.msra.mxu0 %v109
    %1499 = vmatpush.msra.mxu0 %v108
    %1500 = vmatpush.msra.mxu0 %v107
    %1501 = vmatmul.f32.gmra.mxu0 %v1483
    %v1502 = vpop.f32.mrf.mxu0
    %v1503 = vadd.f32 %v245, %v1502
    %1504 = vdwg.mxu0
    %v1505 = vadd.f32 %v1481, %v1503
    %v1506 = vxor.u32 %v1505, 2147483648
    %v1507 = vmul.f32 %v1506, 1.442695
    %v1508 = vpow.pop %v1507
    %v1509 = vadd.f32 %v1508, 1.0
    %v1510 = vrcp.pop %v1509
    %v1511 = vmul.f32 %v1509, %v1510
    %v1512 = vsub.f32 1.0, %v1511
    %v1513 = vmul.f32 %v1510, %v1512
    %v1514 = vadd.f32 %v1510, %v1513
    %vm1515 = vweird.f32 %v1509
    %vm1516 = vweird.f32 %v1510
    %vm1517 = vmor %vm1515, %vm1516
    %v1518 = vsel %vm1517, %v1510, %v1514
    %v1519 = vand.u32 2147483647, %v1509
    %vm1520 = vcmp.eq.f32.partialorder %v1519, 8.507059e+37
    %v1521 = vand.u32 %v1509, 2147483648
    %v1522 = vor.u32 1.1754944e-38, %v1521
    %v1523 = vsel %vm1520, %v1522, %v1518
    %v1524 = vmul.f32 1.0, %v1523
    %1526 = vrot.lane.b32.xlu0 %v1503, 64
    %v1527 = vpop.permute.xlu0 %1526
    %v1529 = vmul.f32 %v1524, %v1527
    %1531 = vrot.lane.b32.xlu0 %v1529, 64
    %v1532 = vpop.permute.xlu0 %1531
    %v1534 = vadd.f32 %v1481, %v1532
    %v1535 = vtanh.pop %v1534
    %v1536 = vsub.f32 1.0, %v1524
    %1538 = vrot.lane.b32.xlu0 %v1535, 96
    %v1539 = vpop.permute.xlu0 %1538
    %v1541 = vmul.f32 %v1536, %v1539
    %v1542 = vmul.f32 %v1524, %v1367
    %v1543 = vadd.f32 %v1541, %v1542
    %1545 = vrot.lane.b32.xlu0 %v1543, 96
    %v1546 = vpop.permute.xlu0 %1545
    %s1548 = scalar_lea.vmem [#allocation10], 14
    %1549 = vst.msk [vmem:[%s1548] sm:$0x3] %vm316, %v1546
    %1551 = vst.msk [vmem:[#allocation2] sm:$0x3] %vm316, %v1460
    %1552 = vst.msk [vmem:[#allocation3] sm:$0x3] %vm316, %v1546
    // Predicated region
    $region58: #{tpu_custom_call.1} parent=1 // pred_check
      %p1553 = pneg %p86
    $region59: #{tpu_custom_call.1} parent=1 // pred_check_branch
      %1555 = sbr.rel (%p1553) target = $region61
    $region60: #{tpu_custom_call.1} parent=1 // pred_region
      %v1556 = vld [vmem:[#allocation2] sm:$0x3]
      %1557 = vst.msk [vmem:[#allocation11] sm:$0x3] %vm316, %v1556
      %v1558 = vld [vmem:[#allocation3] sm:$0x3]
      %s1559 = scalar_lea.vmem [#allocation11], 2
      %1560 = vst.msk [vmem:[%s1559] sm:$0x3] %vm316, %v1558
    $region61: #{tpu_custom_call.1} parent=1 // pred_fallthru
      _
    // Predicated region
    $region62: #{tpu_custom_call.1} parent=1 // pred_check
      _
    $region63: #{tpu_custom_call.1} parent=1 // pred_check_branch
      %1562 = sbr.rel (0) target = $region65
    $region64: #{tpu_custom_call.1} parent=1 // pred_region
      %1564 = vsyncadd [#allocation6], 0
      %s1565 = sshll.u32 [#allocation10], 4
      %s1566 = int_to_ptr.vmem [resolvable:$true] %s1565
      %s1567 = sshll.u32 %s10, 4
      %s1568 = int_to_ptr.hbm [resolvable:$true] %s1567
      %1573 = dma.vmem_to_hbm [thread:$0]  %s1566, 256, %s1568, [#allocation6], 32, 32, 2
    $region65: #{tpu_custom_call.1} parent=1 // pred_fallthru
      _
    // Predicated region
    $region66: #{tpu_custom_call.1} parent=1 // pred_check
      _
    $region67: #{tpu_custom_call.1} parent=1 // pred_check_branch
      %1575 = sbr.rel (0) target = $region69
    $region68: #{tpu_custom_call.1} parent=1 // pred_region
      %1577 = vsyncadd [#allocation12], 0
      %s1578 = sshll.u32 [#allocation11], 4
      %s1579 = int_to_ptr.vmem [resolvable:$true] %s1578
      %s1580 = sshll.u32 %s11, 4
      %s1581 = int_to_ptr.hbm [resolvable:$true] %s1580
      %1586 = dma.vmem_to_hbm [thread:$0]  %s1579, 64, %s1581, [#allocation12], 32, 32, 2
    $region69: #{tpu_custom_call.1} parent=1 // pred_fallthru
      _
    // Predicated region
    $region70: #{tpu_custom_call.1} parent=1 // pred_check
      _
    $region71: #{tpu_custom_call.1} parent=1 // pred_check_branch
      %1588 = sbr.rel (0) target = $region73
    $region72: #{tpu_custom_call.1} parent=1 // pred_region
      %1590 = dma.done [#allocation6], 256
    $region73: #{tpu_custom_call.1} parent=1 // pred_fallthru
      _
    // Predicated region
    $region74: #{tpu_custom_call.1} parent=1 // pred_check
      _
    $region75: #{tpu_custom_call.1} parent=1 // pred_check_branch
      %1592 = sbr.rel (0) target = $region77
    $region76: #{tpu_custom_call.1} parent=1 // pred_region
      %1594 = dma.done [#allocation12], 64
    $region77: #{tpu_custom_call.1} parent=1 // pred_fallthru
      _
    %1595 = vsyncpa [#allocation5], 1
    %1596 = vsyncpa [#allocation8], 1
    %1597 = vsyncpa [#allocation6], 1
    %1598 = vsyncpa [#allocation12], 1

</llo_original>
